<compile_context>
chip_gen: v7x
topology: tpu7x:2x2x1
jax: 0.10.0
libtpu: 0.0.40
codegen_flags: <defaults>
</compile_context>

<pallas_src>
import math
import numpy as np
import jax
import jax.numpy as jnp
from jax.experimental import pallas as pl
from jax.experimental.pallas import tpu as pltpu

# ---------------- configuration (matches PILSTM.__init__ args) ----------------
NUM_FEATURE = 4
NUM_FORWARD = 8
NUM_CLASS = 3
NUM_LSTM_LAYERS = 2          # kernel below is written for exactly 2 layers
SIZE_LSTM = 32
NUM_DENSE_CLASS = 2
NUM_DENSE_LEVEL_DISCHARGE = 2
NUM_DENSE_STEM = 1

BATCH = 2
SEQ = 8
H = SIZE_LSTM
OUT_PAD = 128                # lane-padded fused output width
N_CLASS_FLAT = NUM_FORWARD * NUM_CLASS        # 24
N_LD_FLAT = NUM_FORWARD * 2                   # 16

VMEM_SPEC = pl.BlockSpec(memory_space=pltpu.MemorySpace.VMEM)


# ------------------------------ fused kernel ----------------------------------
def pilstm_kernel(x_ref, wih0_ref, b0_ref, wfused_ref, b1_ref,
                  wtail_ref, btail_ref, out_ref):
    """Entire PILSTM forward.

    x_ref:      (T, B, F)   time-major input
    wih0_ref:   (F, 4H)     layer-0 input->hidden weights (pre-transposed)
    b0_ref:     (1, 4H)     layer-0 b_ih + b_hh
    wfused_ref: (2H, 8H)    [[W_ih1, W_hh0], [W_hh1, 0]]
    b1_ref:     (1, 4H)     layer-1 b_ih + b_hh
    wtail_ref:  (2H, 128)   folded stem+class | stem+level/discharge, lane-padded
    btail_ref:  (1, 128)    folded tail bias, lane-padded
    out_ref:    (B, 128)    lanes 0:24 = class flat, 24:40 = level/discharge flat
    """
    x = x_ref[...]                                   # (T, B, F)
    T, B, _F = x.shape

    # ---- hoisted, non-recurrent layer-0 input projection (+ folded bias) ----
    xw0 = (jnp.dot(x.reshape(T * B, _F), wih0_ref[...],
                   preferred_element_type=jnp.float32)
           + b0_ref[...])                            # (T*B, 4H)
    xw0 = xw0.reshape(T, B, 4 * H)                   # per-step pick is leading-axis

    wf = wfused_ref[...]                             # (2H, 8H)
    b1 = jnp.broadcast_to(b1_ref[...], (B, 4 * H))   # hoisted broadcast

    def gates(z):
        # One sigmoid and one tanh on the full (B, 4H) vreg, then lane-slice.
        s = jax.nn.sigmoid(z)
        th = jnp.tanh(z)
        return (s[:, 0 * H:1 * H],      # i
                s[:, 1 * H:2 * H],      # f
                th[:, 2 * H:3 * H],     # g
                s[:, 3 * H:4 * H])      # o

    zeros = jnp.zeros((B, H), jnp.float32)
    h0, c0, h1, c1 = zeros, zeros, zeros, zeros
    # recurrent (hidden->hidden) contribution to z0_t; zero for t = 0
    hh0 = jnp.zeros((B, 4 * H), jnp.float32)

    # Static unroll over T (=8).
    # NOTE: jnp.dot uses TPU default precision; use precision=HIGHEST for
    # bit-level parity with a float32 PyTorch LSTM (extra MXU passes).
    for t in range(T):
        # ---- layer 0 cell (input projection hoisted, hh part from t-1's dot)
        z0 = xw0[t] + hh0
        i0, f0, g0, o0 = gates(z0)
        c0 = f0 * c0 + i0 * g0
        h0 = o0 * jnp.tanh(c0)

        # ---- ONE fused MXU dot: lanes 0:4H = z1_t, lanes 4H:8H = hh0_{t+1}
        zb = jnp.dot(jnp.concatenate([h0, h1], axis=-1), wf,
                     preferred_element_type=jnp.float32)      # (B, 8H)
        z1 = zb[:, :4 * H] + b1          # vreg-aligned slice (free)
        hh0 = zb[:, 4 * H:]              # vreg-aligned slice (free)

        # ---- layer 1 cell
        i1, f1, g1, o1 = gates(z1)
        c1 = f1 * c1 + i1 * g1
        h1 = o1 * jnp.tanh(c1)

    # hn_to_dense = cat([hn[0], hn[1]], dim=-1)
    hn = jnp.concatenate([h0, h1], axis=-1)          # (B, 2H)

    # Folded stem + both heads: single lane-aligned dot, single unmasked store.
    out_ref[...] = (jnp.dot(hn, wtail_ref[...],
                            preferred_element_type=jnp.float32)
                    + btail_ref[...])


# --------------------------------- wrapper -------------------------------------
def pilstm_forward(x, fused_params):
    """x: (B, T, F) float32 -> (out_class (B,C,Fwd), out_level_discharge (B,Fwd,2))."""
    B = x.shape[0]
    x_tbf = jnp.transpose(x, (1, 0, 2))              # (T, B, F), 256 bytes
    out = pl.pallas_call(
        pilstm_kernel,
        out_shape=jax.ShapeDtypeStruct((B, OUT_PAD), jnp.float32),
        in_specs=[VMEM_SPEC] * 7,
        out_specs=VMEM_SPEC,
    )(x_tbf, *fused_params)
    # Same as torch .view(-1, num_class, num_forward) / .view(-1, num_forward, 2)
    out_class = out[:, :N_CLASS_FLAT].reshape(-1, NUM_CLASS, NUM_FORWARD)
    out_level_discharge = out[:, N_CLASS_FLAT:N_CLASS_FLAT + N_LD_FLAT]
    out_level_discharge = out_level_discharge.reshape(-1, NUM_FORWARD, 2)
    return out_class, out_level_discharge
    # TODO(synk): dense_stem_no_branch / dense_class_no_branch branch is not
    # exercised with this config (dense_level_discharge is non-empty), so it is
    # not implemented here.


# --------------------------- parameter construction ---------------------------
def dense_size_list(input_size, output_size, num_layers):
    step = math.floor((input_size - output_size) / num_layers)
    sizes = [input_size - i * step for i in range(num_layers)]
    sizes.append(output_size)
    return sizes


def init_linear(key, fan_in, fan_out):
    # PyTorch nn.Linear default init: U(-1/sqrt(fan_in), 1/sqrt(fan_in))
    kw, kb = jax.random.split(key)
    bound = 1.0 / math.sqrt(fan_in)
    w_t = jax.random.uniform(kw, (fan_in, fan_out), jnp.float32, -bound, bound)
    b = jax.random.uniform(kb, (1, fan_out), jnp.float32, -bound, bound)
    return w_t, b


def init_dense_stack(key, input_size, output_size, num_layers):
    if num_layers == 0:
        return None
    sizes = dense_size_list(input_size, output_size, num_layers)
    layers = []
    for i in range(num_layers):
        key, sub = jax.random.split(key)
        layers.append(init_linear(sub, sizes[i], sizes[i + 1]))
    return layers


def init_lstm(key):
    # PyTorch nn.LSTM default init: U(-1/sqrt(H), 1/sqrt(H)); gate order i,f,g,o.
    params = []
    for layer in range(NUM_LSTM_LAYERS):
        in_size = NUM_FEATURE if layer == 0 else H
        bound = 1.0 / math.sqrt(H)
        key, k1, k2, k3, k4 = jax.random.split(key, 5)
        wih = jax.random.uniform(k1, (in_size, 4 * H), jnp.float32, -bound, bound)
        whh = jax.random.uniform(k2, (H, 4 * H), jnp.float32, -bound, bound)
        b_ih = jax.random.uniform(k3, (1, 4 * H), jnp.float32, -bound, bound)
        b_hh = jax.random.uniform(k4, (1, 4 * H), jnp.float32, -bound, bound)
        params.append((wih, whh, b_ih + b_hh))
    return params


def prepare_fused_params(lstm_params, stem_layers, class_layers, ld_layers):
    """Pre-stack / fold / pad all weights into kernel argument order (done once)."""
    (wih0, whh0, b0), (wih1, whh1, b1) = lstm_params

    # Fused recurrent block weight: [h0_t | h1_{t-1}] @ [[W_ih1, W_hh0],[W_hh1, 0]]
    #   -> lanes 0:4H = z1_t (pre-bias), lanes 4H:8H = hh contribution to z0_{t+1}
    top = jnp.concatenate([wih1, whh0], axis=1)                      # (H, 8H)
    bot = jnp.concatenate([whh1, jnp.zeros_like(whh0)], axis=1)      # (H, 8H)
    w_fused = jnp.concatenate([top, bot], axis=0)                    # (2H, 8H)

    (ws, bs), = stem_layers
    (wc1, bc1), (wc2, bc2) = class_layers
    (wl1, bl1), (wl2, bl2) = ld_layers

    # Fold stem + heads offline (no activations in the dense stacks -> exact).
    # Done in float64 numpy so folding itself adds no drift.
    ws64, bs64 = np.asarray(ws, np.float64), np.asarray(bs, np.float64)
    wc164, bc164 = np.asarray(wc1, np.float64), np.asarray(bc1, np.float64)
    wc264, bc264 = np.asarray(wc2, np.float64), np.asarray(bc2, np.float64)
    wl164, bl164 = np.asarray(wl1, np.float64), np.asarray(bl1, np.float64)
    wl264, bl264 = np.asarray(wl2, np.float64), np.asarray(bl2, np.float64)

    wc = ws64 @ wc164 @ wc264                                        # (2H, 24)
    bc = bs64 @ wc164 @ wc264 + bc164 @ wc264 + bc264                # (1, 24)
    wl = ws64 @ wl164 @ wl264                                        # (2H, 16)
    bl = bs64 @ wl164 @ wl264 + bl164 @ wl264 + bl264                # (1, 16)

    w_tail = np.concatenate([wc, wl], axis=1)                        # (2H, 40)
    b_tail = np.concatenate([bc, bl], axis=1)                        # (1, 40)
    pad = OUT_PAD - w_tail.shape[1]
    w_tail = np.pad(w_tail, ((0, 0), (0, pad)))                      # (2H, 128)
    b_tail = np.pad(b_tail, ((0, 0), (0, pad)))                      # (1, 128)

    return (wih0, b0, w_fused, b1,
            jnp.asarray(w_tail, jnp.float32), jnp.asarray(b_tail, jnp.float32))


# ----------------------------------- main --------------------------------------
if __name__ == "__main__":
    key = jax.random.PRNGKey(0)
    k_x, k_lstm, k_stem, k_class, k_ld = jax.random.split(key, 5)

    x = jax.random.normal(k_x, (BATCH, SEQ, NUM_FEATURE), jnp.float32)

    lstm_params = init_lstm(k_lstm)
    in_dense = H * NUM_LSTM_LAYERS
    stem_layers = init_dense_stack(k_stem, in_dense, in_dense, NUM_DENSE_STEM)
    class_layers = init_dense_stack(k_class, in_dense,
                                    NUM_FORWARD * NUM_CLASS, NUM_DENSE_CLASS)
    ld_layers = init_dense_stack(k_ld, in_dense,
                                 NUM_FORWARD * 2, NUM_DENSE_LEVEL_DISCHARGE)

    fused_params = prepare_fused_params(lstm_params, stem_layers,
                                        class_layers, ld_layers)

    forward = jax.jit(pilstm_forward)
    out_class, out_level_discharge = forward(x, fused_params)
    jax.block_until_ready((out_class, out_level_discharge))

    assert out_class.shape == (BATCH, NUM_CLASS, NUM_FORWARD)
    assert out_level_discharge.shape == (BATCH, NUM_FORWARD, 2)
    print("KERNEL_OK")
</pallas_src>

<mosaic_0001>
module attributes {stable_mosaic.version = 11 : i64} {
  func.func @pilstm_kernel(%arg0: memref<8x2x4xf32, #tpu.memory_space<vmem>>, %arg1: memref<4x128xf32, #tpu.memory_space<vmem>>, %arg2: memref<1x128xf32, #tpu.memory_space<vmem>>, %arg3: memref<64x256xf32, #tpu.memory_space<vmem>>, %arg4: memref<1x128xf32, #tpu.memory_space<vmem>>, %arg5: memref<64x128xf32, #tpu.memory_space<vmem>>, %arg6: memref<1x128xf32, #tpu.memory_space<vmem>>, %arg7: memref<2x128xf32, #tpu.memory_space<vmem>>) attributes {dimension_semantics = [], scalar_prefetch = 0 : i64, scratch_operands = 0 : i64, tpu.core_type = #tpu.core_type<tc>} {
    %c0 = arith.constant 0 : index
    %c0_0 = arith.constant 0 : index
    %c0_1 = arith.constant 0 : index
    %0 = vector.load %arg0[%c0, %c0_0, %c0_1] : memref<8x2x4xf32, #tpu.memory_space<vmem>>, vector<8x2x4xf32>
    %1 = vector.shape_cast %0 : vector<8x2x4xf32> to vector<16x4xf32>
    %c0_2 = arith.constant 0 : index
    %c0_3 = arith.constant 0 : index
    %2 = vector.load %arg1[%c0_2, %c0_3] : memref<4x128xf32, #tpu.memory_space<vmem>>, vector<4x128xf32>
    %cst = arith.constant dense<0.000000e+00> : vector<16x128xf32>
    %3 = tpu.matmul %1, %2, %cst {dimension_numbers = #tpu.dot_dimension_numbers<[1], [0], [0], [1], [0, 0, 1, 1], [], []>} : vector<16x4xf32>, vector<4x128xf32>, vector<16x128xf32> -> vector<16x128xf32>
    %c0_4 = arith.constant 0 : index
    %c0_5 = arith.constant 0 : index
    %4 = vector.load %arg2[%c0_4, %c0_5] : memref<1x128xf32, #tpu.memory_space<vmem>>, vector<1x128xf32>
    %5 = vector.broadcast %4 : vector<1x128xf32> to vector<16x128xf32>
    %6 = arith.addf %3, %5 : vector<16x128xf32>
    %7 = vector.shape_cast %6 : vector<16x128xf32> to vector<8x2x128xf32>
    %c0_6 = arith.constant 0 : index
    %c0_7 = arith.constant 0 : index
    %8 = vector.load %arg3[%c0_6, %c0_7] : memref<64x256xf32, #tpu.memory_space<vmem>>, vector<64x256xf32>
    %c0_8 = arith.constant 0 : index
    %c0_9 = arith.constant 0 : index
    %9 = vector.load %arg4[%c0_8, %c0_9] : memref<1x128xf32, #tpu.memory_space<vmem>>, vector<1x128xf32>
    %10 = vector.shape_cast %9 : vector<1x128xf32> to vector<1x128xf32>
    %11 = vector.broadcast %10 : vector<1x128xf32> to vector<2x128xf32>
    %cst_10 = arith.constant 0.000000e+00 : f32
    %12 = vector.broadcast %cst_10 : f32 to vector<2x32xf32>
    %cst_11 = arith.constant 0.000000e+00 : f32
    %13 = vector.broadcast %cst_11 : f32 to vector<2x128xf32>
    %14 = vector.extract_strided_slice %7 {offsets = [0, 0, 0], sizes = [1, 2, 128], strides = [1, 1, 1]} : vector<8x2x128xf32> to vector<1x2x128xf32>
    %15 = vector.shape_cast %14 : vector<1x2x128xf32> to vector<2x128xf32>
    %16 = arith.addf %15, %13 : vector<2x128xf32>
    %17 = arith.negf %16 : vector<2x128xf32>
    %18 = math.exp %17 : vector<2x128xf32>
    %cst_12 = arith.constant 1.000000e+00 : f32
    %19 = vector.broadcast %cst_12 : f32 to vector<2x128xf32>
    %20 = arith.addf %19, %18 : vector<2x128xf32>
    %21 = arith.divf %19, %20 : vector<2x128xf32>
    %22 = math.tanh %16 : vector<2x128xf32>
    %23 = vector.extract_strided_slice %21 {offsets = [0, 0], sizes = [2, 32], strides = [1, 1]} : vector<2x128xf32> to vector<2x32xf32>
    %24 = vector.extract_strided_slice %21 {offsets = [0, 32], sizes = [2, 32], strides = [1, 1]} : vector<2x128xf32> to vector<2x32xf32>
    %25 = vector.extract_strided_slice %22 {offsets = [0, 64], sizes = [2, 32], strides = [1, 1]} : vector<2x128xf32> to vector<2x32xf32>
    %26 = vector.extract_strided_slice %21 {offsets = [0, 96], sizes = [2, 32], strides = [1, 1]} : vector<2x128xf32> to vector<2x32xf32>
    %27 = arith.mulf %24, %12 : vector<2x32xf32>
    %28 = arith.mulf %23, %25 : vector<2x32xf32>
    %29 = arith.addf %27, %28 : vector<2x32xf32>
    %30 = math.tanh %29 : vector<2x32xf32>
    %31 = arith.mulf %26, %30 : vector<2x32xf32>
    %32 = tpu.concatenate %31, %12 in 1 : vector<2x32xf32>, vector<2x32xf32> -> vector<2x64xf32>
    %cst_13 = arith.constant dense<0.000000e+00> : vector<2x256xf32>
    %33 = tpu.matmul %32, %8, %cst_13 {dimension_numbers = #tpu.dot_dimension_numbers<[1], [0], [0], [1], [0, 0, 1, 1], [], []>} : vector<2x64xf32>, vector<64x256xf32>, vector<2x256xf32> -> vector<2x256xf32>
    %34 = vector.extract_strided_slice %33 {offsets = [0, 0], sizes = [2, 128], strides = [1, 1]} : vector<2x256xf32> to vector<2x128xf32>
    %35 = arith.addf %34, %11 : vector<2x128xf32>
    %36 = vector.extract_strided_slice %33 {offsets = [0, 128], sizes = [2, 128], strides = [1, 1]} : vector<2x256xf32> to vector<2x128xf32>
    %37 = arith.negf %35 : vector<2x128xf32>
    %38 = math.exp %37 : vector<2x128xf32>
    %cst_14 = arith.constant 1.000000e+00 : f32
    %39 = vector.broadcast %cst_14 : f32 to vector<2x128xf32>
    %40 = arith.addf %39, %38 : vector<2x128xf32>
    %41 = arith.divf %39, %40 : vector<2x128xf32>
    %42 = math.tanh %35 : vector<2x128xf32>
    %43 = vector.extract_strided_slice %41 {offsets = [0, 0], sizes = [2, 32], strides = [1, 1]} : vector<2x128xf32> to vector<2x32xf32>
    %44 = vector.extract_strided_slice %41 {offsets = [0, 32], sizes = [2, 32], strides = [1, 1]} : vector<2x128xf32> to vector<2x32xf32>
    %45 = vector.extract_strided_slice %42 {offsets = [0, 64], sizes = [2, 32], strides = [1, 1]} : vector<2x128xf32> to vector<2x32xf32>
    %46 = vector.extract_strided_slice %41 {offsets = [0, 96], sizes = [2, 32], strides = [1, 1]} : vector<2x128xf32> to vector<2x32xf32>
    %47 = arith.mulf %44, %12 : vector<2x32xf32>
    %48 = arith.mulf %43, %45 : vector<2x32xf32>
    %49 = arith.addf %47, %48 : vector<2x32xf32>
    %50 = math.tanh %49 : vector<2x32xf32>
    %51 = arith.mulf %46, %50 : vector<2x32xf32>
    %52 = vector.extract_strided_slice %7 {offsets = [1, 0, 0], sizes = [1, 2, 128], strides = [1, 1, 1]} : vector<8x2x128xf32> to vector<1x2x128xf32>
    %53 = vector.shape_cast %52 : vector<1x2x128xf32> to vector<2x128xf32>
    %54 = arith.addf %53, %36 : vector<2x128xf32>
    %55 = arith.negf %54 : vector<2x128xf32>
    %56 = math.exp %55 : vector<2x128xf32>
    %cst_15 = arith.constant 1.000000e+00 : f32
    %57 = vector.broadcast %cst_15 : f32 to vector<2x128xf32>
    %58 = arith.addf %57, %56 : vector<2x128xf32>
    %59 = arith.divf %57, %58 : vector<2x128xf32>
    %60 = math.tanh %54 : vector<2x128xf32>
    %61 = vector.extract_strided_slice %59 {offsets = [0, 0], sizes = [2, 32], strides = [1, 1]} : vector<2x128xf32> to vector<2x32xf32>
    %62 = vector.extract_strided_slice %59 {offsets = [0, 32], sizes = [2, 32], strides = [1, 1]} : vector<2x128xf32> to vector<2x32xf32>
    %63 = vector.extract_strided_slice %60 {offsets = [0, 64], sizes = [2, 32], strides = [1, 1]} : vector<2x128xf32> to vector<2x32xf32>
    %64 = vector.extract_strided_slice %59 {offsets = [0, 96], sizes = [2, 32], strides = [1, 1]} : vector<2x128xf32> to vector<2x32xf32>
    %65 = arith.mulf %62, %29 : vector<2x32xf32>
    %66 = arith.mulf %61, %63 : vector<2x32xf32>
    %67 = arith.addf %65, %66 : vector<2x32xf32>
    %68 = math.tanh %67 : vector<2x32xf32>
    %69 = arith.mulf %64, %68 : vector<2x32xf32>
    %70 = tpu.concatenate %69, %51 in 1 : vector<2x32xf32>, vector<2x32xf32> -> vector<2x64xf32>
    %cst_16 = arith.constant dense<0.000000e+00> : vector<2x256xf32>
    %71 = tpu.matmul %70, %8, %cst_16 {dimension_numbers = #tpu.dot_dimension_numbers<[1], [0], [0], [1], [0, 0, 1, 1], [], []>} : vector<2x64xf32>, vector<64x256xf32>, vector<2x256xf32> -> vector<2x256xf32>
    %72 = vector.extract_strided_slice %71 {offsets = [0, 0], sizes = [2, 128], strides = [1, 1]} : vector<2x256xf32> to vector<2x128xf32>
    %73 = arith.addf %72, %11 : vector<2x128xf32>
    %74 = vector.extract_strided_slice %71 {offsets = [0, 128], sizes = [2, 128], strides = [1, 1]} : vector<2x256xf32> to vector<2x128xf32>
    %75 = arith.negf %73 : vector<2x128xf32>
    %76 = math.exp %75 : vector<2x128xf32>
    %cst_17 = arith.constant 1.000000e+00 : f32
    %77 = vector.broadcast %cst_17 : f32 to vector<2x128xf32>
    %78 = arith.addf %77, %76 : vector<2x128xf32>
    %79 = arith.divf %77, %78 : vector<2x128xf32>
    %80 = math.tanh %73 : vector<2x128xf32>
    %81 = vector.extract_strided_slice %79 {offsets = [0, 0], sizes = [2, 32], strides = [1, 1]} : vector<2x128xf32> to vector<2x32xf32>
    %82 = vector.extract_strided_slice %79 {offsets = [0, 32], sizes = [2, 32], strides = [1, 1]} : vector<2x128xf32> to vector<2x32xf32>
    %83 = vector.extract_strided_slice %80 {offsets = [0, 64], sizes = [2, 32], strides = [1, 1]} : vector<2x128xf32> to vector<2x32xf32>
    %84 = vector.extract_strided_slice %79 {offsets = [0, 96], sizes = [2, 32], strides = [1, 1]} : vector<2x128xf32> to vector<2x32xf32>
    %85 = arith.mulf %82, %49 : vector<2x32xf32>
    %86 = arith.mulf %81, %83 : vector<2x32xf32>
    %87 = arith.addf %85, %86 : vector<2x32xf32>
    %88 = math.tanh %87 : vector<2x32xf32>
    %89 = arith.mulf %84, %88 : vector<2x32xf32>
    %90 = vector.extract_strided_slice %7 {offsets = [2, 0, 0], sizes = [1, 2, 128], strides = [1, 1, 1]} : vector<8x2x128xf32> to vector<1x2x128xf32>
    %91 = vector.shape_cast %90 : vector<1x2x128xf32> to vector<2x128xf32>
    %92 = arith.addf %91, %74 : vector<2x128xf32>
    %93 = arith.negf %92 : vector<2x128xf32>
    %94 = math.exp %93 : vector<2x128xf32>
    %cst_18 = arith.constant 1.000000e+00 : f32
    %95 = vector.broadcast %cst_18 : f32 to vector<2x128xf32>
    %96 = arith.addf %95, %94 : vector<2x128xf32>
    %97 = arith.divf %95, %96 : vector<2x128xf32>
    %98 = math.tanh %92 : vector<2x128xf32>
    %99 = vector.extract_strided_slice %97 {offsets = [0, 0], sizes = [2, 32], strides = [1, 1]} : vector<2x128xf32> to vector<2x32xf32>
    %100 = vector.extract_strided_slice %97 {offsets = [0, 32], sizes = [2, 32], strides = [1, 1]} : vector<2x128xf32> to vector<2x32xf32>
    %101 = vector.extract_strided_slice %98 {offsets = [0, 64], sizes = [2, 32], strides = [1, 1]} : vector<2x128xf32> to vector<2x32xf32>
    %102 = vector.extract_strided_slice %97 {offsets = [0, 96], sizes = [2, 32], strides = [1, 1]} : vector<2x128xf32> to vector<2x32xf32>
    %103 = arith.mulf %100, %67 : vector<2x32xf32>
    %104 = arith.mulf %99, %101 : vector<2x32xf32>
    %105 = arith.addf %103, %104 : vector<2x32xf32>
    %106 = math.tanh %105 : vector<2x32xf32>
    %107 = arith.mulf %102, %106 : vector<2x32xf32>
    %108 = tpu.concatenate %107, %89 in 1 : vector<2x32xf32>, vector<2x32xf32> -> vector<2x64xf32>
    %cst_19 = arith.constant dense<0.000000e+00> : vector<2x256xf32>
    %109 = tpu.matmul %108, %8, %cst_19 {dimension_numbers = #tpu.dot_dimension_numbers<[1], [0], [0], [1], [0, 0, 1, 1], [], []>} : vector<2x64xf32>, vector<64x256xf32>, vector<2x256xf32> -> vector<2x256xf32>
    %110 = vector.extract_strided_slice %109 {offsets = [0, 0], sizes = [2, 128], strides = [1, 1]} : vector<2x256xf32> to vector<2x128xf32>
    %111 = arith.addf %110, %11 : vector<2x128xf32>
    %112 = vector.extract_strided_slice %109 {offsets = [0, 128], sizes = [2, 128], strides = [1, 1]} : vector<2x256xf32> to vector<2x128xf32>
    %113 = arith.negf %111 : vector<2x128xf32>
    %114 = math.exp %113 : vector<2x128xf32>
    %cst_20 = arith.constant 1.000000e+00 : f32
    %115 = vector.broadcast %cst_20 : f32 to vector<2x128xf32>
    %116 = arith.addf %115, %114 : vector<2x128xf32>
    %117 = arith.divf %115, %116 : vector<2x128xf32>
    %118 = math.tanh %111 : vector<2x128xf32>
    %119 = vector.extract_strided_slice %117 {offsets = [0, 0], sizes = [2, 32], strides = [1, 1]} : vector<2x128xf32> to vector<2x32xf32>
    %120 = vector.extract_strided_slice %117 {offsets = [0, 32], sizes = [2, 32], strides = [1, 1]} : vector<2x128xf32> to vector<2x32xf32>
    %121 = vector.extract_strided_slice %118 {offsets = [0, 64], sizes = [2, 32], strides = [1, 1]} : vector<2x128xf32> to vector<2x32xf32>
    %122 = vector.extract_strided_slice %117 {offsets = [0, 96], sizes = [2, 32], strides = [1, 1]} : vector<2x128xf32> to vector<2x32xf32>
    %123 = arith.mulf %120, %87 : vector<2x32xf32>
    %124 = arith.mulf %119, %121 : vector<2x32xf32>
    %125 = arith.addf %123, %124 : vector<2x32xf32>
    %126 = math.tanh %125 : vector<2x32xf32>
    %127 = arith.mulf %122, %126 : vector<2x32xf32>
    %128 = vector.extract_strided_slice %7 {offsets = [3, 0, 0], sizes = [1, 2, 128], strides = [1, 1, 1]} : vector<8x2x128xf32> to vector<1x2x128xf32>
    %129 = vector.shape_cast %128 : vector<1x2x128xf32> to vector<2x128xf32>
    %130 = arith.addf %129, %112 : vector<2x128xf32>
    %131 = arith.negf %130 : vector<2x128xf32>
    %132 = math.exp %131 : vector<2x128xf32>
    %cst_21 = arith.constant 1.000000e+00 : f32
    %133 = vector.broadcast %cst_21 : f32 to vector<2x128xf32>
    %134 = arith.addf %133, %132 : vector<2x128xf32>
    %135 = arith.divf %133, %134 : vector<2x128xf32>
    %136 = math.tanh %130 : vector<2x128xf32>
    %137 = vector.extract_strided_slice %135 {offsets = [0, 0], sizes = [2, 32], strides = [1, 1]} : vector<2x128xf32> to vector<2x32xf32>
    %138 = vector.extract_strided_slice %135 {offsets = [0, 32], sizes = [2, 32], strides = [1, 1]} : vector<2x128xf32> to vector<2x32xf32>
    %139 = vector.extract_strided_slice %136 {offsets = [0, 64], sizes = [2, 32], strides = [1, 1]} : vector<2x128xf32> to vector<2x32xf32>
    %140 = vector.extract_strided_slice %135 {offsets = [0, 96], sizes = [2, 32], strides = [1, 1]} : vector<2x128xf32> to vector<2x32xf32>
    %141 = arith.mulf %138, %105 : vector<2x32xf32>
    %142 = arith.mulf %137, %139 : vector<2x32xf32>
    %143 = arith.addf %141, %142 : vector<2x32xf32>
    %144 = math.tanh %143 : vector<2x32xf32>
    %145 = arith.mulf %140, %144 : vector<2x32xf32>
    %146 = tpu.concatenate %145, %127 in 1 : vector<2x32xf32>, vector<2x32xf32> -> vector<2x64xf32>
    %cst_22 = arith.constant dense<0.000000e+00> : vector<2x256xf32>
    %147 = tpu.matmul %146, %8, %cst_22 {dimension_numbers = #tpu.dot_dimension_numbers<[1], [0], [0], [1], [0, 0, 1, 1], [], []>} : vector<2x64xf32>, vector<64x256xf32>, vector<2x256xf32> -> vector<2x256xf32>
    %148 = vector.extract_strided_slice %147 {offsets = [0, 0], sizes = [2, 128], strides = [1, 1]} : vector<2x256xf32> to vector<2x128xf32>
    %149 = arith.addf %148, %11 : vector<2x128xf32>
    %150 = vector.extract_strided_slice %147 {offsets = [0, 128], sizes = [2, 128], strides = [1, 1]} : vector<2x256xf32> to vector<2x128xf32>
    %151 = arith.negf %149 : vector<2x128xf32>
    %152 = math.exp %151 : vector<2x128xf32>
    %cst_23 = arith.constant 1.000000e+00 : f32
    %153 = vector.broadcast %cst_23 : f32 to vector<2x128xf32>
    %154 = arith.addf %153, %152 : vector<2x128xf32>
    %155 = arith.divf %153, %154 : vector<2x128xf32>
    %156 = math.tanh %149 : vector<2x128xf32>
    %157 = vector.extract_strided_slice %155 {offsets = [0, 0], sizes = [2, 32], strides = [1, 1]} : vector<2x128xf32> to vector<2x32xf32>
    %158 = vector.extract_strided_slice %155 {offsets = [0, 32], sizes = [2, 32], strides = [1, 1]} : vector<2x128xf32> to vector<2x32xf32>
    %159 = vector.extract_strided_slice %156 {offsets = [0, 64], sizes = [2, 32], strides = [1, 1]} : vector<2x128xf32> to vector<2x32xf32>
    %160 = vector.extract_strided_slice %155 {offsets = [0, 96], sizes = [2, 32], strides = [1, 1]} : vector<2x128xf32> to vector<2x32xf32>
    %161 = arith.mulf %158, %125 : vector<2x32xf32>
    %162 = arith.mulf %157, %159 : vector<2x32xf32>
    %163 = arith.addf %161, %162 : vector<2x32xf32>
    %164 = math.tanh %163 : vector<2x32xf32>
    %165 = arith.mulf %160, %164 : vector<2x32xf32>
    %166 = vector.extract_strided_slice %7 {offsets = [4, 0, 0], sizes = [1, 2, 128], strides = [1, 1, 1]} : vector<8x2x128xf32> to vector<1x2x128xf32>
    %167 = vector.shape_cast %166 : vector<1x2x128xf32> to vector<2x128xf32>
    %168 = arith.addf %167, %150 : vector<2x128xf32>
    %169 = arith.negf %168 : vector<2x128xf32>
    %170 = math.exp %169 : vector<2x128xf32>
    %cst_24 = arith.constant 1.000000e+00 : f32
    %171 = vector.broadcast %cst_24 : f32 to vector<2x128xf32>
    %172 = arith.addf %171, %170 : vector<2x128xf32>
    %173 = arith.divf %171, %172 : vector<2x128xf32>
    %174 = math.tanh %168 : vector<2x128xf32>
    %175 = vector.extract_strided_slice %173 {offsets = [0, 0], sizes = [2, 32], strides = [1, 1]} : vector<2x128xf32> to vector<2x32xf32>
    %176 = vector.extract_strided_slice %173 {offsets = [0, 32], sizes = [2, 32], strides = [1, 1]} : vector<2x128xf32> to vector<2x32xf32>
    %177 = vector.extract_strided_slice %174 {offsets = [0, 64], sizes = [2, 32], strides = [1, 1]} : vector<2x128xf32> to vector<2x32xf32>
    %178 = vector.extract_strided_slice %173 {offsets = [0, 96], sizes = [2, 32], strides = [1, 1]} : vector<2x128xf32> to vector<2x32xf32>
    %179 = arith.mulf %176, %143 : vector<2x32xf32>
    %180 = arith.mulf %175, %177 : vector<2x32xf32>
    %181 = arith.addf %179, %180 : vector<2x32xf32>
    %182 = math.tanh %181 : vector<2x32xf32>
    %183 = arith.mulf %178, %182 : vector<2x32xf32>
    %184 = tpu.concatenate %183, %165 in 1 : vector<2x32xf32>, vector<2x32xf32> -> vector<2x64xf32>
    %cst_25 = arith.constant dense<0.000000e+00> : vector<2x256xf32>
    %185 = tpu.matmul %184, %8, %cst_25 {dimension_numbers = #tpu.dot_dimension_numbers<[1], [0], [0], [1], [0, 0, 1, 1], [], []>} : vector<2x64xf32>, vector<64x256xf32>, vector<2x256xf32> -> vector<2x256xf32>
    %186 = vector.extract_strided_slice %185 {offsets = [0, 0], sizes = [2, 128], strides = [1, 1]} : vector<2x256xf32> to vector<2x128xf32>
    %187 = arith.addf %186, %11 : vector<2x128xf32>
    %188 = vector.extract_strided_slice %185 {offsets = [0, 128], sizes = [2, 128], strides = [1, 1]} : vector<2x256xf32> to vector<2x128xf32>
    %189 = arith.negf %187 : vector<2x128xf32>
    %190 = math.exp %189 : vector<2x128xf32>
    %cst_26 = arith.constant 1.000000e+00 : f32
    %191 = vector.broadcast %cst_26 : f32 to vector<2x128xf32>
    %192 = arith.addf %191, %190 : vector<2x128xf32>
    %193 = arith.divf %191, %192 : vector<2x128xf32>
    %194 = math.tanh %187 : vector<2x128xf32>
    %195 = vector.extract_strided_slice %193 {offsets = [0, 0], sizes = [2, 32], strides = [1, 1]} : vector<2x128xf32> to vector<2x32xf32>
    %196 = vector.extract_strided_slice %193 {offsets = [0, 32], sizes = [2, 32], strides = [1, 1]} : vector<2x128xf32> to vector<2x32xf32>
    %197 = vector.extract_strided_slice %194 {offsets = [0, 64], sizes = [2, 32], strides = [1, 1]} : vector<2x128xf32> to vector<2x32xf32>
    %198 = vector.extract_strided_slice %193 {offsets = [0, 96], sizes = [2, 32], strides = [1, 1]} : vector<2x128xf32> to vector<2x32xf32>
    %199 = arith.mulf %196, %163 : vector<2x32xf32>
    %200 = arith.mulf %195, %197 : vector<2x32xf32>
    %201 = arith.addf %199, %200 : vector<2x32xf32>
    %202 = math.tanh %201 : vector<2x32xf32>
    %203 = arith.mulf %198, %202 : vector<2x32xf32>
    %204 = vector.extract_strided_slice %7 {offsets = [5, 0, 0], sizes = [1, 2, 128], strides = [1, 1, 1]} : vector<8x2x128xf32> to vector<1x2x128xf32>
    %205 = vector.shape_cast %204 : vector<1x2x128xf32> to vector<2x128xf32>
    %206 = arith.addf %205, %188 : vector<2x128xf32>
    %207 = arith.negf %206 : vector<2x128xf32>
    %208 = math.exp %207 : vector<2x128xf32>
    %cst_27 = arith.constant 1.000000e+00 : f32
    %209 = vector.broadcast %cst_27 : f32 to vector<2x128xf32>
    %210 = arith.addf %209, %208 : vector<2x128xf32>
    %211 = arith.divf %209, %210 : vector<2x128xf32>
    %212 = math.tanh %206 : vector<2x128xf32>
    %213 = vector.extract_strided_slice %211 {offsets = [0, 0], sizes = [2, 32], strides = [1, 1]} : vector<2x128xf32> to vector<2x32xf32>
    %214 = vector.extract_strided_slice %211 {offsets = [0, 32], sizes = [2, 32], strides = [1, 1]} : vector<2x128xf32> to vector<2x32xf32>
    %215 = vector.extract_strided_slice %212 {offsets = [0, 64], sizes = [2, 32], strides = [1, 1]} : vector<2x128xf32> to vector<2x32xf32>
    %216 = vector.extract_strided_slice %211 {offsets = [0, 96], sizes = [2, 32], strides = [1, 1]} : vector<2x128xf32> to vector<2x32xf32>
    %217 = arith.mulf %214, %181 : vector<2x32xf32>
    %218 = arith.mulf %213, %215 : vector<2x32xf32>
    %219 = arith.addf %217, %218 : vector<2x32xf32>
    %220 = math.tanh %219 : vector<2x32xf32>
    %221 = arith.mulf %216, %220 : vector<2x32xf32>
    %222 = tpu.concatenate %221, %203 in 1 : vector<2x32xf32>, vector<2x32xf32> -> vector<2x64xf32>
    %cst_28 = arith.constant dense<0.000000e+00> : vector<2x256xf32>
    %223 = tpu.matmul %222, %8, %cst_28 {dimension_numbers = #tpu.dot_dimension_numbers<[1], [0], [0], [1], [0, 0, 1, 1], [], []>} : vector<2x64xf32>, vector<64x256xf32>, vector<2x256xf32> -> vector<2x256xf32>
    %224 = vector.extract_strided_slice %223 {offsets = [0, 0], sizes = [2, 128], strides = [1, 1]} : vector<2x256xf32> to vector<2x128xf32>
    %225 = arith.addf %224, %11 : vector<2x128xf32>
    %226 = vector.extract_strided_slice %223 {offsets = [0, 128], sizes = [2, 128], strides = [1, 1]} : vector<2x256xf32> to vector<2x128xf32>
    %227 = arith.negf %225 : vector<2x128xf32>
    %228 = math.exp %227 : vector<2x128xf32>
    %cst_29 = arith.constant 1.000000e+00 : f32
    %229 = vector.broadcast %cst_29 : f32 to vector<2x128xf32>
    %230 = arith.addf %229, %228 : vector<2x128xf32>
    %231 = arith.divf %229, %230 : vector<2x128xf32>
    %232 = math.tanh %225 : vector<2x128xf32>
    %233 = vector.extract_strided_slice %231 {offsets = [0, 0], sizes = [2, 32], strides = [1, 1]} : vector<2x128xf32> to vector<2x32xf32>
    %234 = vector.extract_strided_slice %231 {offsets = [0, 32], sizes = [2, 32], strides = [1, 1]} : vector<2x128xf32> to vector<2x32xf32>
    %235 = vector.extract_strided_slice %232 {offsets = [0, 64], sizes = [2, 32], strides = [1, 1]} : vector<2x128xf32> to vector<2x32xf32>
    %236 = vector.extract_strided_slice %231 {offsets = [0, 96], sizes = [2, 32], strides = [1, 1]} : vector<2x128xf32> to vector<2x32xf32>
    %237 = arith.mulf %234, %201 : vector<2x32xf32>
    %238 = arith.mulf %233, %235 : vector<2x32xf32>
    %239 = arith.addf %237, %238 : vector<2x32xf32>
    %240 = math.tanh %239 : vector<2x32xf32>
    %241 = arith.mulf %236, %240 : vector<2x32xf32>
    %242 = vector.extract_strided_slice %7 {offsets = [6, 0, 0], sizes = [1, 2, 128], strides = [1, 1, 1]} : vector<8x2x128xf32> to vector<1x2x128xf32>
    %243 = vector.shape_cast %242 : vector<1x2x128xf32> to vector<2x128xf32>
    %244 = arith.addf %243, %226 : vector<2x128xf32>
    %245 = arith.negf %244 : vector<2x128xf32>
    %246 = math.exp %245 : vector<2x128xf32>
    %cst_30 = arith.constant 1.000000e+00 : f32
    %247 = vector.broadcast %cst_30 : f32 to vector<2x128xf32>
    %248 = arith.addf %247, %246 : vector<2x128xf32>
    %249 = arith.divf %247, %248 : vector<2x128xf32>
    %250 = math.tanh %244 : vector<2x128xf32>
    %251 = vector.extract_strided_slice %249 {offsets = [0, 0], sizes = [2, 32], strides = [1, 1]} : vector<2x128xf32> to vector<2x32xf32>
    %252 = vector.extract_strided_slice %249 {offsets = [0, 32], sizes = [2, 32], strides = [1, 1]} : vector<2x128xf32> to vector<2x32xf32>
    %253 = vector.extract_strided_slice %250 {offsets = [0, 64], sizes = [2, 32], strides = [1, 1]} : vector<2x128xf32> to vector<2x32xf32>
    %254 = vector.extract_strided_slice %249 {offsets = [0, 96], sizes = [2, 32], strides = [1, 1]} : vector<2x128xf32> to vector<2x32xf32>
    %255 = arith.mulf %252, %219 : vector<2x32xf32>
    %256 = arith.mulf %251, %253 : vector<2x32xf32>
    %257 = arith.addf %255, %256 : vector<2x32xf32>
    %258 = math.tanh %257 : vector<2x32xf32>
    %259 = arith.mulf %254, %258 : vector<2x32xf32>
    %260 = tpu.concatenate %259, %241 in 1 : vector<2x32xf32>, vector<2x32xf32> -> vector<2x64xf32>
    %cst_31 = arith.constant dense<0.000000e+00> : vector<2x256xf32>
    %261 = tpu.matmul %260, %8, %cst_31 {dimension_numbers = #tpu.dot_dimension_numbers<[1], [0], [0], [1], [0, 0, 1, 1], [], []>} : vector<2x64xf32>, vector<64x256xf32>, vector<2x256xf32> -> vector<2x256xf32>
    %262 = vector.extract_strided_slice %261 {offsets = [0, 0], sizes = [2, 128], strides = [1, 1]} : vector<2x256xf32> to vector<2x128xf32>
    %263 = arith.addf %262, %11 : vector<2x128xf32>
    %264 = vector.extract_strided_slice %261 {offsets = [0, 128], sizes = [2, 128], strides = [1, 1]} : vector<2x256xf32> to vector<2x128xf32>
    %265 = arith.negf %263 : vector<2x128xf32>
    %266 = math.exp %265 : vector<2x128xf32>
    %cst_32 = arith.constant 1.000000e+00 : f32
    %267 = vector.broadcast %cst_32 : f32 to vector<2x128xf32>
    %268 = arith.addf %267, %266 : vector<2x128xf32>
    %269 = arith.divf %267, %268 : vector<2x128xf32>
    %270 = math.tanh %263 : vector<2x128xf32>
    %271 = vector.extract_strided_slice %269 {offsets = [0, 0], sizes = [2, 32], strides = [1, 1]} : vector<2x128xf32> to vector<2x32xf32>
    %272 = vector.extract_strided_slice %269 {offsets = [0, 32], sizes = [2, 32], strides = [1, 1]} : vector<2x128xf32> to vector<2x32xf32>
    %273 = vector.extract_strided_slice %270 {offsets = [0, 64], sizes = [2, 32], strides = [1, 1]} : vector<2x128xf32> to vector<2x32xf32>
    %274 = vector.extract_strided_slice %269 {offsets = [0, 96], sizes = [2, 32], strides = [1, 1]} : vector<2x128xf32> to vector<2x32xf32>
    %275 = arith.mulf %272, %239 : vector<2x32xf32>
    %276 = arith.mulf %271, %273 : vector<2x32xf32>
    %277 = arith.addf %275, %276 : vector<2x32xf32>
    %278 = math.tanh %277 : vector<2x32xf32>
    %279 = arith.mulf %274, %278 : vector<2x32xf32>
    %280 = vector.extract_strided_slice %7 {offsets = [7, 0, 0], sizes = [1, 2, 128], strides = [1, 1, 1]} : vector<8x2x128xf32> to vector<1x2x128xf32>
    %281 = vector.shape_cast %280 : vector<1x2x128xf32> to vector<2x128xf32>
    %282 = arith.addf %281, %264 : vector<2x128xf32>
    %283 = arith.negf %282 : vector<2x128xf32>
    %284 = math.exp %283 : vector<2x128xf32>
    %cst_33 = arith.constant 1.000000e+00 : f32
    %285 = vector.broadcast %cst_33 : f32 to vector<2x128xf32>
    %286 = arith.addf %285, %284 : vector<2x128xf32>
    %287 = arith.divf %285, %286 : vector<2x128xf32>
    %288 = math.tanh %282 : vector<2x128xf32>
    %289 = vector.extract_strided_slice %287 {offsets = [0, 0], sizes = [2, 32], strides = [1, 1]} : vector<2x128xf32> to vector<2x32xf32>
    %290 = vector.extract_strided_slice %287 {offsets = [0, 32], sizes = [2, 32], strides = [1, 1]} : vector<2x128xf32> to vector<2x32xf32>
    %291 = vector.extract_strided_slice %288 {offsets = [0, 64], sizes = [2, 32], strides = [1, 1]} : vector<2x128xf32> to vector<2x32xf32>
    %292 = vector.extract_strided_slice %287 {offsets = [0, 96], sizes = [2, 32], strides = [1, 1]} : vector<2x128xf32> to vector<2x32xf32>
    %293 = arith.mulf %290, %257 : vector<2x32xf32>
    %294 = arith.mulf %289, %291 : vector<2x32xf32>
    %295 = arith.addf %293, %294 : vector<2x32xf32>
    %296 = math.tanh %295 : vector<2x32xf32>
    %297 = arith.mulf %292, %296 : vector<2x32xf32>
    %298 = tpu.concatenate %297, %279 in 1 : vector<2x32xf32>, vector<2x32xf32> -> vector<2x64xf32>
    %cst_34 = arith.constant dense<0.000000e+00> : vector<2x256xf32>
    %299 = tpu.matmul %298, %8, %cst_34 {dimension_numbers = #tpu.dot_dimension_numbers<[1], [0], [0], [1], [0, 0, 1, 1], [], []>} : vector<2x64xf32>, vector<64x256xf32>, vector<2x256xf32> -> vector<2x256xf32>
    %300 = vector.extract_strided_slice %299 {offsets = [0, 0], sizes = [2, 128], strides = [1, 1]} : vector<2x256xf32> to vector<2x128xf32>
    %301 = arith.addf %300, %11 : vector<2x128xf32>
    %302 = arith.negf %301 : vector<2x128xf32>
    %303 = math.exp %302 : vector<2x128xf32>
    %cst_35 = arith.constant 1.000000e+00 : f32
    %304 = vector.broadcast %cst_35 : f32 to vector<2x128xf32>
    %305 = arith.addf %304, %303 : vector<2x128xf32>
    %306 = arith.divf %304, %305 : vector<2x128xf32>
    %307 = math.tanh %301 : vector<2x128xf32>
    %308 = vector.extract_strided_slice %306 {offsets = [0, 0], sizes = [2, 32], strides = [1, 1]} : vector<2x128xf32> to vector<2x32xf32>
    %309 = vector.extract_strided_slice %306 {offsets = [0, 32], sizes = [2, 32], strides = [1, 1]} : vector<2x128xf32> to vector<2x32xf32>
    %310 = vector.extract_strided_slice %307 {offsets = [0, 64], sizes = [2, 32], strides = [1, 1]} : vector<2x128xf32> to vector<2x32xf32>
    %311 = vector.extract_strided_slice %306 {offsets = [0, 96], sizes = [2, 32], strides = [1, 1]} : vector<2x128xf32> to vector<2x32xf32>
    %312 = arith.mulf %309, %277 : vector<2x32xf32>
    %313 = arith.mulf %308, %310 : vector<2x32xf32>
    %314 = arith.addf %312, %313 : vector<2x32xf32>
    %315 = math.tanh %314 : vector<2x32xf32>
    %316 = arith.mulf %311, %315 : vector<2x32xf32>
    %317 = tpu.concatenate %297, %316 in 1 : vector<2x32xf32>, vector<2x32xf32> -> vector<2x64xf32>
    %c0_36 = arith.constant 0 : index
    %c0_37 = arith.constant 0 : index
    %318 = vector.load %arg5[%c0_36, %c0_37] : memref<64x128xf32, #tpu.memory_space<vmem>>, vector<64x128xf32>
    %cst_38 = arith.constant dense<0.000000e+00> : vector<2x128xf32>
    %319 = tpu.matmul %317, %318, %cst_38 {dimension_numbers = #tpu.dot_dimension_numbers<[1], [0], [0], [1], [0, 0, 1, 1], [], []>} : vector<2x64xf32>, vector<64x128xf32>, vector<2x128xf32> -> vector<2x128xf32>
    %c0_39 = arith.constant 0 : index
    %c0_40 = arith.constant 0 : index
    %320 = vector.load %arg6[%c0_39, %c0_40] : memref<1x128xf32, #tpu.memory_space<vmem>>, vector<1x128xf32>
    %321 = vector.broadcast %320 : vector<1x128xf32> to vector<2x128xf32>
    %322 = arith.addf %319, %321 : vector<2x128xf32>
    %c0_41 = arith.constant 0 : index
    %c0_42 = arith.constant 0 : index
    %323 = vector.load %arg7[%c0_41, %c0_42] : memref<2x128xf32, #tpu.memory_space<vmem>>, vector<2x128xf32>
    tpu.vector_store %arg7[%c0_41, %c0_42], %322 {strides = array<i32>} : memref<2x128xf32, #tpu.memory_space<vmem>>, vector<2x128xf32>,
    return
  }
}

</mosaic_0001>

<llo_original>
// kernel: pilstm_forward.1
$region0: #{pilstm_forward.1}
  #allocation0 [shape = 'u32[]', space=smem, size = 0x4, offset = 0x4, fixed_abs, tag = 'smem constant byte address 0x4 - core index']
  #allocation1 [shape = 'u32[144,128]{1,0:T(1,128)}', space=vmem, size = 0x12000, scoped, tag = 'internal scratch']
  %s0 = inlined_call_operand.vmem [shape: f32[8,2,4], index: 0, kind: input, shape index: {}]
  %s1 = inlined_call_operand.vmem [shape: f32[4,128], index: 1, kind: input, shape index: {}]
  %s2 = inlined_call_operand.vmem [shape: f32[1,128], index: 2, kind: input, shape index: {}]
  %s3 = inlined_call_operand.hbm [shape: f32[64,256], index: 3, kind: input, shape index: {}]
  %s4 = inlined_call_operand.vmem [shape: f32[1,128], index: 4, kind: input, shape index: {}]
  %s5 = inlined_call_operand.hbm [shape: f32[64,128], index: 5, kind: input, shape index: {}]
  %s6 = inlined_call_operand.vmem [shape: f32[1,128], index: 6, kind: input, shape index: {}]
  %s7 = inlined_call_operand.vmem [shape: f32[2,128], index: 7, kind: output, shape index: {}]
  %s8 = sld [smem:[#allocation0]]
  $region46: #{pilstm_forward.1} parent=0
    _
  %s10 = ssub.s32 1, %s8
  %s11 = scalar_select 0, %s10, %s8
  $region1: #{pilstm_forward.1} parent=0
    #allocation2 [shape = 'u8[65536]{0}', space=vmem, size = 0x10000, scoped, tag = 'input window, operand 3, single buffered']
    #allocation3 [shape = 's32[1]{0}', space=sflag, size = 0x4, scoped, tag = 'scoped memory for pilstm_forward.1']
    #allocation4 [shape = 'u8[32768]{0}', space=vmem, size = 0x8000, scoped, tag = 'input window, operand 5, single buffered']
    #allocation5 [shape = 's32[1]{0}', space=sflag, size = 0x4, scoped, tag = 'scoped memory for pilstm_forward.1']
    %12 = vsyncpa [#allocation3], 0
    %13 = vsyncpa [#allocation5], 0
    // Predicated region
    $region2: #{pilstm_forward.1} parent=1 // pred_check
      _
    $region3: #{pilstm_forward.1} parent=1 // pred_check_branch
      %15 = sbr.rel (0) target = $region5
    $region4: #{pilstm_forward.1} parent=1 // pred_region
      _
    $region5: #{pilstm_forward.1} parent=1 // pred_fallthru
      _
    // Predicated region
    $region6: #{pilstm_forward.1} parent=1 // pred_check
      _
    $region7: #{pilstm_forward.1} parent=1 // pred_check_branch
      %17 = sbr.rel (0) target = $region9
    $region8: #{pilstm_forward.1} parent=1 // pred_region
      _
    $region9: #{pilstm_forward.1} parent=1 // pred_fallthru
      _
    // Predicated region
    $region10: #{pilstm_forward.1} parent=1 // pred_check
      _
    $region11: #{pilstm_forward.1} parent=1 // pred_check_branch
      %19 = sbr.rel (0) target = $region13
    $region12: #{pilstm_forward.1} parent=1 // pred_region
      _
    $region13: #{pilstm_forward.1} parent=1 // pred_fallthru
      _
    // Predicated region
    $region14: #{pilstm_forward.1} parent=1 // pred_check
      _
    $region15: #{pilstm_forward.1} parent=1 // pred_check_branch
      %21 = sbr.rel (0) target = $region17
    $region16: #{pilstm_forward.1} parent=1 // pred_region
      %s23 = ssub.s32 2048, 2048
      %24 = vsyncadd [#allocation3], %s23
      %s25 = sshll.u32 [#allocation2], 4
      %s26 = int_to_ptr.vmem [resolvable:$true] %s25
      %31 = dma.hbm_to_vmem [thread:$0]  %s3, 2048, %s26, [#allocation3], 256, 256, 16
    $region17: #{pilstm_forward.1} parent=1 // pred_fallthru
      _
    // Predicated region
    $region18: #{pilstm_forward.1} parent=1 // pred_check
      _
    $region19: #{pilstm_forward.1} parent=1 // pred_check_branch
      %33 = sbr.rel (0) target = $region21
    $region20: #{pilstm_forward.1} parent=1 // pred_region
      _
    $region21: #{pilstm_forward.1} parent=1 // pred_fallthru
      _
    // Predicated region
    $region22: #{pilstm_forward.1} parent=1 // pred_check
      _
    $region23: #{pilstm_forward.1} parent=1 // pred_check_branch
      %35 = sbr.rel (0) target = $region25
    $region24: #{pilstm_forward.1} parent=1 // pred_region
      %s37 = ssub.s32 1024, 1024
      %38 = vsyncadd [#allocation5], %s37
      %s39 = sshll.u32 [#allocation4], 4
      %s40 = int_to_ptr.vmem [resolvable:$true] %s39
      %45 = dma.hbm_to_vmem [thread:$0]  %s5, 1024, %s40, [#allocation5], 128, 128, 8
    $region25: #{pilstm_forward.1} parent=1 // pred_fallthru
      _
    // Predicated region
    $region26: #{pilstm_forward.1} parent=1 // pred_check
      _
    $region27: #{pilstm_forward.1} parent=1 // pred_check_branch
      %47 = sbr.rel (0) target = $region29
    $region28: #{pilstm_forward.1} parent=1 // pred_region
      _
    $region29: #{pilstm_forward.1} parent=1 // pred_fallthru
      _
    // Predicated region
    $region30: #{pilstm_forward.1} parent=1 // pred_check
      _
    $region31: #{pilstm_forward.1} parent=1 // pred_check_branch
      %49 = sbr.rel (0) target = $region33
    $region32: #{pilstm_forward.1} parent=1 // pred_region
      %50 = dma.done [#allocation3], 2048
    $region33: #{pilstm_forward.1} parent=1 // pred_fallthru
      _
    // Predicated region
    $region34: #{pilstm_forward.1} parent=1 // pred_check
      _
    $region35: #{pilstm_forward.1} parent=1 // pred_check_branch
      %52 = sbr.rel (0) target = $region37
    $region36: #{pilstm_forward.1} parent=1 // pred_region
      %53 = dma.done [#allocation5], 1024
    $region37: #{pilstm_forward.1} parent=1 // pred_fallthru
      _
    %v54 = vld [vmem:[%s0] sm:$0x3]
    %v55 = vld [vmem:[%s0 + $0x2] sm:$0x3]
    %v56 = vld [vmem:[%s0 + $0x4] sm:$0x3]
    %v57 = vld [vmem:[%s0 + $0x6] sm:$0x3]
    %v58 = vld [vmem:[%s0 + $0x8] sm:$0x3]
    %v59 = vld [vmem:[%s0 + $0xa] sm:$0x3]
    %v60 = vld [vmem:[%s0 + $0xc] sm:$0x3]
    %v61 = vld [vmem:[%s0 + $0xe] sm:$0x3]
    %v62 = vld [vmem:[%s1] sm:$0xf]
    %v63 = vld [vmem:[%s2] sm:$0x1]
    %v65 = vlaneseq
    %v66 = vshrl.u32 %v65, 7
    %v67 = vsub.s32 0, %v66
    %v68 = vrot.slane %v63, %v67
    %v78 = vcombine.low %v54, %v55
    %v79 = vcombine.low %v56, %v57
    %v81 = vunpack.c.l.s4 1983009808
    %v82 = vunpack.c.0.s8 %v81
    %v83 = vlaneseq
    %v84 = vshrl.u32 %v83, 7
    %v85 = vsub.s32 %v82, %v84
    %v86 = vrot.slane %v78, %v85
    %v88 = vunpack.c.l.s4 1983009808
    %v89 = vunpack.c.0.s8 %v88
    %v90 = vlaneseq
    %v91 = vshrl.u32 %v90, 7
    %v92 = vsub.s32 %v89, %v91
    %v93 = vrot.slane %v79, %v92
    %v94 = vcombine.low %v86, %v93
    %v95 = vcombine.low %v58, %v59
    %v96 = vcombine.low %v60, %v61
    %v98 = vunpack.c.l.s4 1983009808
    %v99 = vunpack.c.0.s8 %v98
    %v100 = vlaneseq
    %v101 = vshrl.u32 %v100, 7
    %v102 = vsub.s32 %v99, %v101
    %v103 = vrot.slane %v95, %v102
    %v105 = vunpack.c.l.s4 1983009808
    %v106 = vunpack.c.0.s8 %v105
    %v107 = vlaneseq
    %v108 = vshrl.u32 %v107, 7
    %v109 = vsub.s32 %v106, %v108
    %v110 = vrot.slane %v96, %v109
    %v111 = vcombine.low %v103, %v110
    %vm112 = vcmask 31744
    %v113 = vsel %vm112, %v94, 0
    %v115 = vsel %vm112, %v111, 0
    %vm117 = vcmask 1043456
    %v119 = vsel %vm117, %v62, 0
    %121 = vmatprep.subr.mxu0 0.0
    %122 = vmatpush1.msra.mxu0 %v119
    %123 = vmatprep.subr.mxu0 0.0
    %124 = vmatpush1.msra.mxu0 0.0
    %125 = vmatprep.subr.mxu0 0.0
    %126 = vmatpush1.msra.mxu0 0.0
    %127 = vmatprep.subr.mxu0 0.0
    %128 = vmatpush1.msra.mxu0 0.0
    %129 = vmatprep.subr.mxu0 0.0
    %130 = vmatpush1.msra.mxu0 0.0
    %131 = vmatprep.subr.mxu0 0.0
    %132 = vmatpush1.msra.mxu0 0.0
    %133 = vmatprep.subr.mxu0 0.0
    %134 = vmatpush1.msra.mxu0 0.0
    %135 = vmatprep.subr.mxu0 0.0
    %136 = vmatpush1.msra.mxu0 0.0
    %137 = vmatprep.subr.mxu0 0.0
    %138 = vmatpush1.msra.mxu0 0.0
    %139 = vmatprep.subr.mxu0 0.0
    %140 = vmatpush1.msra.mxu0 0.0
    %141 = vmatprep.subr.mxu0 0.0
    %142 = vmatpush1.msra.mxu0 0.0
    %143 = vmatprep.subr.mxu0 0.0
    %144 = vmatpush1.msra.mxu0 0.0
    %145 = vmatprep.subr.mxu0 0.0
    %146 = vmatpush1.msra.mxu0 0.0
    %147 = vmatprep.subr.mxu0 0.0
    %148 = vmatpush1.msra.mxu0 0.0
    %149 = vmatprep.subr.mxu0 0.0
    %150 = vmatpush1.msra.mxu0 0.0
    %151 = vmatprep.subr.mxu0 0.0
    %152 = vmatpush1.msra.mxu0 0.0
    %153 = vmatprep.subr.mxu0 0.0
    %154 = vmatpush1.msra.mxu0 0.0
    %155 = vmatprep.subr.mxu0 0.0
    %156 = vmatpush1.msra.mxu0 0.0
    %157 = vmatprep.subr.mxu0 0.0
    %158 = vmatpush1.msra.mxu0 0.0
    %159 = vmatprep.subr.mxu0 0.0
    %160 = vmatpush1.msra.mxu0 0.0
    %161 = vmatprep.subr.mxu0 0.0
    %162 = vmatpush1.msra.mxu0 0.0
    %163 = vmatprep.subr.mxu0 0.0
    %164 = vmatpush1.msra.mxu0 0.0
    %165 = vmatprep.subr.mxu0 0.0
    %166 = vmatpush1.msra.mxu0 0.0
    %167 = vmatprep.subr.mxu0 0.0
    %168 = vmatpush1.msra.mxu0 0.0
    %169 = vmatprep.subr.mxu0 0.0
    %170 = vmatpush1.msra.mxu0 0.0
    %171 = vmatprep.subr.mxu0 0.0
    %172 = vmatpush1.msra.mxu0 0.0
    %173 = vmatprep.subr.mxu0 0.0
    %174 = vmatpush1.msra.mxu0 0.0
    %175 = vmatprep.subr.mxu0 0.0
    %176 = vmatpush1.msra.mxu0 0.0
    %177 = vmatprep.subr.mxu0 0.0
    %178 = vmatpush1.msra.mxu0 0.0
    %179 = vmatprep.subr.mxu0 0.0
    %180 = vmatpush1.msra.mxu0 0.0
    %181 = vmatprep.subr.mxu0 0.0
    %182 = vmatpush1.msra.mxu0 0.0
    %183 = vmatprep.subr.mxu0 0.0
    %184 = vmatpush1.msra.mxu0 0.0
    %185 = vmatprep.mubr.f32.mxu0 0.0
    %186 = vmatmul.mubr.f32.gmra.mrb[0].mxu0 %v113
    %v187 = vpop.f32.mrb[0].mxu0
    %v188 = vadd.f32 %v68, %v187
    %v189 = vpop.f32.mrb[0].mxu0
    %190 = vmatprep.mubr.f32.mxu0 0.0
    %191 = vmatmul.mubr.f32.gmra.mrb[0].mxu0 %v115
    %v192 = vpop.f32.mrb[0].mxu0
    %v193 = vadd.f32 %v68, %v192
    %v194 = vpop.f32.mrb[0].mxu0
    %195 = vdwg.mxu0
    %v198 = vcombine.high %v188, %v188
    %v200 = vunpack.c.l.s4 1983009808
    %v201 = vunpack.c.0.s8 %v200
    %v202 = vlaneseq
    %v203 = vshrl.u32 %v202, 7
    %v204 = vsub.s32 %v201, %v203
    %v205 = vrot.slane %v188, %v204
    %v207 = vunpack.c.l.s4 1983009808
    %v208 = vunpack.c.0.s8 %v207
    %v209 = vlaneseq
    %v210 = vshrl.u32 %v209, 7
    %v211 = vsub.s32 %v208, %v210
    %v212 = vrot.slane %v198, %v211
    %v213 = vcombine.high %v205, %v205
    %v214 = vcombine.high %v212, %v212
    %v215 = vcombine.high %v193, %v193
    %v217 = vunpack.c.l.s4 1983009808
    %v218 = vunpack.c.0.s8 %v217
    %v219 = vlaneseq
    %v220 = vshrl.u32 %v219, 7
    %v221 = vsub.s32 %v218, %v220
    %v222 = vrot.slane %v193, %v221
    %v224 = vunpack.c.l.s4 1983009808
    %v225 = vunpack.c.0.s8 %v224
    %v226 = vlaneseq
    %v227 = vshrl.u32 %v226, 7
    %v228 = vsub.s32 %v225, %v227
    %v229 = vrot.slane %v215, %v228
    %v230 = vcombine.high %v222, %v222
    %v231 = vcombine.high %v229, %v229
    %v240 = vld [vmem:[#allocation2] sm:$0xff]
    %v241 = vld [vmem:[#allocation2 + $0x8] sm:$0xff]
    %v242 = vld [vmem:[#allocation2 + $0x10] sm:$0xff]
    %v243 = vld [vmem:[#allocation2 + $0x18] sm:$0xff]
    %v244 = vld [vmem:[#allocation2 + $0x20] sm:$0xff]
    %v245 = vld [vmem:[#allocation2 + $0x28] sm:$0xff]
    %v246 = vld [vmem:[#allocation2 + $0x30] sm:$0xff]
    %v247 = vld [vmem:[#allocation2 + $0x38] sm:$0xff]
    %v248 = vld [vmem:[#allocation2 + $0x40] sm:$0xff]
    %v249 = vld [vmem:[#allocation2 + $0x48] sm:$0xff]
    %v250 = vld [vmem:[#allocation2 + $0x50] sm:$0xff]
    %v251 = vld [vmem:[#allocation2 + $0x58] sm:$0xff]
    %v252 = vld [vmem:[#allocation2 + $0x60] sm:$0xff]
    %v253 = vld [vmem:[#allocation2 + $0x68] sm:$0xff]
    %v254 = vld [vmem:[#allocation2 + $0x70] sm:$0xff]
    %v255 = vld [vmem:[#allocation2 + $0x78] sm:$0xff]
    %v256 = vld [vmem:[%s4] sm:$0x1]
    %v258 = vlaneseq
    %v259 = vshrl.u32 %v258, 7
    %v260 = vsub.s32 0, %v259
    %v261 = vrot.slane %v256, %v260
    %v263 = vadd.f32 %v205, 0.0
    %v264 = vxor.u32 %v263, 2147483648
    %v265 = vmul.f32 %v264, 1.442695
    %v266 = vpow.pop %v265
    %v267 = vadd.f32 %v266, 1.0
    %v268 = vrcp.pop %v267
    %v269 = vmul.f32 1.0, %v268
    %v270 = vtanh.pop %v263
    %v271 = vmul.f32 %v269, 0.0
    %273 = vrot.lane.b32.xlu0 %v270, 64
    %v274 = vpop.permute.xlu0 %273
    %v276 = vmul.f32 %v269, %v274
    %278 = vrot.lane.b32.xlu0 %v276, 32
    %v279 = vpop.permute.xlu0 %278
    %v281 = vadd.f32 %v271, %v279
    %v282 = vtanh.pop %v281
    %284 = vrot.lane.b32.xlu0 %v282, 64
    %v285 = vpop.permute.xlu0 %284
    %v287 = vmul.f32 %v269, %v285
    %v290 = vunpack.c.l.s4 1983009808
    %v291 = vunpack.c.0.s8 %v290
    %v292 = vlaneseq
    %v293 = vshrl.u32 %v292, 7
    %v294 = vsub.s32 %v291, %v293
    %v295 = vrot.slane %v287, %v294
    %296 = vrot.lane.b32.xlu0 %v295, 32
    %v297 = vpop.permute.xlu0 %296
    %vm299 = vcmask 261120
    %v300 = vsel %vm299, %v297, 0.0
    %vm301 = vcmask 523264
    %v303 = vsel %vm301, %v300, 0
    %305 = vmatprep.subr.mxu0 %v241
    %306 = vmatpush1.msra.mxu0 %v240
    %307 = vmatprep.subr.mxu0 %v243
    %308 = vmatpush1.msra.mxu0 %v242
    %309 = vmatprep.subr.mxu0 %v245
    %310 = vmatpush1.msra.mxu0 %v244
    %311 = vmatprep.subr.mxu0 %v247
    %312 = vmatpush1.msra.mxu0 %v246
    %313 = vmatprep.subr.mxu0 %v249
    %314 = vmatpush1.msra.mxu0 %v248
    %315 = vmatprep.subr.mxu0 %v251
    %316 = vmatpush1.msra.mxu0 %v250
    %317 = vmatprep.subr.mxu0 %v253
    %318 = vmatpush1.msra.mxu0 %v252
    %319 = vmatprep.subr.mxu0 %v255
    %320 = vmatpush1.msra.mxu0 %v254
    %321 = vmatprep.subr.mxu0 0.0
    %322 = vmatpush1.msra.mxu0 0.0
    %323 = vmatprep.subr.mxu0 0.0
    %324 = vmatpush1.msra.mxu0 0.0
    %325 = vmatprep.subr.mxu0 0.0
    %326 = vmatpush1.msra.mxu0 0.0
    %327 = vmatprep.subr.mxu0 0.0
    %328 = vmatpush1.msra.mxu0 0.0
    %329 = vmatprep.subr.mxu0 0.0
    %330 = vmatpush1.msra.mxu0 0.0
    %331 = vmatprep.subr.mxu0 0.0
    %332 = vmatpush1.msra.mxu0 0.0
    %333 = vmatprep.subr.mxu0 0.0
    %334 = vmatpush1.msra.mxu0 0.0
    %335 = vmatprep.subr.mxu0 0.0
    %336 = vmatpush1.msra.mxu0 0.0
    %337 = vmatprep.subr.mxu0 0.0
    %338 = vmatpush1.msra.mxu0 0.0
    %339 = vmatprep.subr.mxu0 0.0
    %340 = vmatpush1.msra.mxu0 0.0
    %341 = vmatprep.subr.mxu0 0.0
    %342 = vmatpush1.msra.mxu0 0.0
    %343 = vmatprep.subr.mxu0 0.0
    %344 = vmatpush1.msra.mxu0 0.0
    %345 = vmatprep.subr.mxu0 0.0
    %346 = vmatpush1.msra.mxu0 0.0
    %347 = vmatprep.subr.mxu0 0.0
    %348 = vmatpush1.msra.mxu0 0.0
    %349 = vmatprep.subr.mxu0 0.0
    %350 = vmatpush1.msra.mxu0 0.0
    %351 = vmatprep.subr.mxu0 0.0
    %352 = vmatpush1.msra.mxu0 0.0
    %353 = vmatprep.subr.mxu0 0.0
    %354 = vmatpush1.msra.mxu0 0.0
    %355 = vmatprep.subr.mxu0 0.0
    %356 = vmatpush1.msra.mxu0 0.0
    %357 = vmatprep.subr.mxu0 0.0
    %358 = vmatpush1.msra.mxu0 0.0
    %359 = vmatprep.subr.mxu0 0.0
    %360 = vmatpush1.msra.mxu0 0.0
    %361 = vmatprep.subr.mxu0 0.0
    %362 = vmatpush1.msra.mxu0 0.0
    %363 = vmatprep.subr.mxu0 0.0
    %364 = vmatpush1.msra.mxu0 0.0
    %365 = vmatprep.subr.mxu0 0.0
    %366 = vmatpush1.msra.mxu0 0.0
    %367 = vmatprep.subr.mxu0 0.0
    %368 = vmatpush1.msra.mxu0 0.0
    %369 = vmatprep.mubr.f32.mxu0 0.0
    %370 = vmatmul.mubr.f32.gmra.mrb[0].mxu0 %v303
    %v371 = vpop.f32.mrb[0].mxu0
    %v372 = vadd.f32 0.0, %v371
    %v373 = vpop.f32.mrb[0].mxu0
    %v374 = vadd.f32 0.0, %v373
    %375 = vdwg.mxu0
    %v376 = vadd.f32 %v372, %v261
    %v377 = vxor.u32 %v376, 2147483648
    %v378 = vmul.f32 %v377, 1.442695
    %v379 = vpow.pop %v378
    %v380 = vadd.f32 %v379, 1.0
    %v381 = vrcp.pop %v380
    %v382 = vmul.f32 1.0, %v381
    %v383 = vtanh.pop %v376
    %v384 = vmul.f32 %v382, 0.0
    %386 = vrot.lane.b32.xlu0 %v383, 64
    %v387 = vpop.permute.xlu0 %386
    %v389 = vmul.f32 %v382, %v387
    %391 = vrot.lane.b32.xlu0 %v389, 32
    %v392 = vpop.permute.xlu0 %391
    %v394 = vadd.f32 %v384, %v392
    %v395 = vtanh.pop %v394
    %397 = vrot.lane.b32.xlu0 %v395, 64
    %v398 = vpop.permute.xlu0 %397
    %v400 = vmul.f32 %v382, %v398
    %v401 = vadd.f32 %v213, %v374
    %v402 = vxor.u32 %v401, 2147483648
    %v403 = vmul.f32 %v402, 1.442695
    %v404 = vpow.pop %v403
    %v405 = vadd.f32 %v404, 1.0
    %v406 = vrcp.pop %v405
    %v407 = vmul.f32 1.0, %v406
    %v408 = vtanh.pop %v401
    %v409 = vmul.f32 %v407, %v281
    %411 = vrot.lane.b32.xlu0 %v408, 64
    %v412 = vpop.permute.xlu0 %411
    %v414 = vmul.f32 %v407, %v412
    %416 = vrot.lane.b32.xlu0 %v414, 32
    %v417 = vpop.permute.xlu0 %416
    %v419 = vadd.f32 %v409, %v417
    %v420 = vtanh.pop %v419
    %422 = vrot.lane.b32.xlu0 %v420, 64
    %v423 = vpop.permute.xlu0 %422
    %v425 = vmul.f32 %v407, %v423
    %v428 = vunpack.c.l.s4 1983009808
    %v429 = vunpack.c.0.s8 %v428
    %v430 = vlaneseq
    %v431 = vshrl.u32 %v430, 7
    %v432 = vsub.s32 %v429, %v431
    %v433 = vrot.slane %v425, %v432
    %434 = vrot.lane.b32.xlu0 %v433, 32
    %v435 = vpop.permute.xlu0 %434
    %438 = vrot.lane.b32.xlu0 %v400, 64
    %v439 = vpop.permute.xlu0 %438
    %v441 = vsel %vm299, %v435, %v439
    %v443 = vsel %vm301, %v441, 0
    %445 = vmatprep.subr.mxu0 %v241
    %446 = vmatpush1.msra.mxu0 %v240
    %447 = vmatprep.subr.mxu0 %v243
    %448 = vmatpush1.msra.mxu0 %v242
    %449 = vmatprep.subr.mxu0 %v245
    %450 = vmatpush1.msra.mxu0 %v244
    %451 = vmatprep.subr.mxu0 %v247
    %452 = vmatpush1.msra.mxu0 %v246
    %453 = vmatprep.subr.mxu0 %v249
    %454 = vmatpush1.msra.mxu0 %v248
    %455 = vmatprep.subr.mxu0 %v251
    %456 = vmatpush1.msra.mxu0 %v250
    %457 = vmatprep.subr.mxu0 %v253
    %458 = vmatpush1.msra.mxu0 %v252
    %459 = vmatprep.subr.mxu0 %v255
    %460 = vmatpush1.msra.mxu0 %v254
    %461 = vmatprep.subr.mxu0 0.0
    %462 = vmatpush1.msra.mxu0 0.0
    %463 = vmatprep.subr.mxu0 0.0
    %464 = vmatpush1.msra.mxu0 0.0
    %465 = vmatprep.subr.mxu0 0.0
    %466 = vmatpush1.msra.mxu0 0.0
    %467 = vmatprep.subr.mxu0 0.0
    %468 = vmatpush1.msra.mxu0 0.0
    %469 = vmatprep.subr.mxu0 0.0
    %470 = vmatpush1.msra.mxu0 0.0
    %471 = vmatprep.subr.mxu0 0.0
    %472 = vmatpush1.msra.mxu0 0.0
    %473 = vmatprep.subr.mxu0 0.0
    %474 = vmatpush1.msra.mxu0 0.0
    %475 = vmatprep.subr.mxu0 0.0
    %476 = vmatpush1.msra.mxu0 0.0
    %477 = vmatprep.subr.mxu0 0.0
    %478 = vmatpush1.msra.mxu0 0.0
    %479 = vmatprep.subr.mxu0 0.0
    %480 = vmatpush1.msra.mxu0 0.0
    %481 = vmatprep.subr.mxu0 0.0
    %482 = vmatpush1.msra.mxu0 0.0
    %483 = vmatprep.subr.mxu0 0.0
    %484 = vmatpush1.msra.mxu0 0.0
    %485 = vmatprep.subr.mxu0 0.0
    %486 = vmatpush1.msra.mxu0 0.0
    %487 = vmatprep.subr.mxu0 0.0
    %488 = vmatpush1.msra.mxu0 0.0
    %489 = vmatprep.subr.mxu0 0.0
    %490 = vmatpush1.msra.mxu0 0.0
    %491 = vmatprep.subr.mxu0 0.0
    %492 = vmatpush1.msra.mxu0 0.0
    %493 = vmatprep.subr.mxu0 0.0
    %494 = vmatpush1.msra.mxu0 0.0
    %495 = vmatprep.subr.mxu0 0.0
    %496 = vmatpush1.msra.mxu0 0.0
    %497 = vmatprep.subr.mxu0 0.0
    %498 = vmatpush1.msra.mxu0 0.0
    %499 = vmatprep.subr.mxu0 0.0
    %500 = vmatpush1.msra.mxu0 0.0
    %501 = vmatprep.subr.mxu0 0.0
    %502 = vmatpush1.msra.mxu0 0.0
    %503 = vmatprep.subr.mxu0 0.0
    %504 = vmatpush1.msra.mxu0 0.0
    %505 = vmatprep.subr.mxu0 0.0
    %506 = vmatpush1.msra.mxu0 0.0
    %507 = vmatprep.subr.mxu0 0.0
    %508 = vmatpush1.msra.mxu0 0.0
    %509 = vmatprep.mubr.f32.mxu0 0.0
    %510 = vmatmul.mubr.f32.gmra.mrb[0].mxu0 %v443
    %v511 = vpop.f32.mrb[0].mxu0
    %v512 = vadd.f32 0.0, %v511
    %v513 = vpop.f32.mrb[0].mxu0
    %v514 = vadd.f32 0.0, %v513
    %515 = vdwg.mxu0
    %v516 = vadd.f32 %v512, %v261
    %v517 = vxor.u32 %v516, 2147483648
    %v518 = vmul.f32 %v517, 1.442695
    %v519 = vpow.pop %v518
    %v520 = vadd.f32 %v519, 1.0
    %v521 = vrcp.pop %v520
    %v522 = vmul.f32 1.0, %v521
    %v523 = vtanh.pop %v516
    %v524 = vmul.f32 %v522, %v394
    %526 = vrot.lane.b32.xlu0 %v523, 64
    %v527 = vpop.permute.xlu0 %526
    %v529 = vmul.f32 %v522, %v527
    %531 = vrot.lane.b32.xlu0 %v529, 32
    %v532 = vpop.permute.xlu0 %531
    %v534 = vadd.f32 %v524, %v532
    %v535 = vtanh.pop %v534
    %537 = vrot.lane.b32.xlu0 %v535, 64
    %v538 = vpop.permute.xlu0 %537
    %v540 = vmul.f32 %v522, %v538
    %v541 = vadd.f32 %v212, %v514
    %v542 = vxor.u32 %v541, 2147483648
    %v543 = vmul.f32 %v542, 1.442695
    %v544 = vpow.pop %v543
    %v545 = vadd.f32 %v544, 1.0
    %v546 = vrcp.pop %v545
    %v547 = vmul.f32 1.0, %v546
    %v548 = vtanh.pop %v541
    %v549 = vmul.f32 %v547, %v419
    %551 = vrot.lane.b32.xlu0 %v548, 64
    %v552 = vpop.permute.xlu0 %551
    %v554 = vmul.f32 %v547, %v552
    %556 = vrot.lane.b32.xlu0 %v554, 32
    %v557 = vpop.permute.xlu0 %556
    %v559 = vadd.f32 %v549, %v557
    %v560 = vtanh.pop %v559
    %562 = vrot.lane.b32.xlu0 %v560, 64
    %v563 = vpop.permute.xlu0 %562
    %v565 = vmul.f32 %v547, %v563
    %v568 = vunpack.c.l.s4 1983009808
    %v569 = vunpack.c.0.s8 %v568
    %v570 = vlaneseq
    %v571 = vshrl.u32 %v570, 7
    %v572 = vsub.s32 %v569, %v571
    %v573 = vrot.slane %v565, %v572
    %574 = vrot.lane.b32.xlu0 %v573, 32
    %v575 = vpop.permute.xlu0 %574
    %578 = vrot.lane.b32.xlu0 %v540, 64
    %v579 = vpop.permute.xlu0 %578
    %v581 = vsel %vm299, %v575, %v579
    %v583 = vsel %vm301, %v581, 0
    %585 = vmatprep.subr.mxu0 %v241
    %586 = vmatpush1.msra.mxu0 %v240
    %587 = vmatprep.subr.mxu0 %v243
    %588 = vmatpush1.msra.mxu0 %v242
    %589 = vmatprep.subr.mxu0 %v245
    %590 = vmatpush1.msra.mxu0 %v244
    %591 = vmatprep.subr.mxu0 %v247
    %592 = vmatpush1.msra.mxu0 %v246
    %593 = vmatprep.subr.mxu0 %v249
    %594 = vmatpush1.msra.mxu0 %v248
    %595 = vmatprep.subr.mxu0 %v251
    %596 = vmatpush1.msra.mxu0 %v250
    %597 = vmatprep.subr.mxu0 %v253
    %598 = vmatpush1.msra.mxu0 %v252
    %599 = vmatprep.subr.mxu0 %v255
    %600 = vmatpush1.msra.mxu0 %v254
    %601 = vmatprep.subr.mxu0 0.0
    %602 = vmatpush1.msra.mxu0 0.0
    %603 = vmatprep.subr.mxu0 0.0
    %604 = vmatpush1.msra.mxu0 0.0
    %605 = vmatprep.subr.mxu0 0.0
    %606 = vmatpush1.msra.mxu0 0.0
    %607 = vmatprep.subr.mxu0 0.0
    %608 = vmatpush1.msra.mxu0 0.0
    %609 = vmatprep.subr.mxu0 0.0
    %610 = vmatpush1.msra.mxu0 0.0
    %611 = vmatprep.subr.mxu0 0.0
    %612 = vmatpush1.msra.mxu0 0.0
    %613 = vmatprep.subr.mxu0 0.0
    %614 = vmatpush1.msra.mxu0 0.0
    %615 = vmatprep.subr.mxu0 0.0
    %616 = vmatpush1.msra.mxu0 0.0
    %617 = vmatprep.subr.mxu0 0.0
    %618 = vmatpush1.msra.mxu0 0.0
    %619 = vmatprep.subr.mxu0 0.0
    %620 = vmatpush1.msra.mxu0 0.0
    %621 = vmatprep.subr.mxu0 0.0
    %622 = vmatpush1.msra.mxu0 0.0
    %623 = vmatprep.subr.mxu0 0.0
    %624 = vmatpush1.msra.mxu0 0.0
    %625 = vmatprep.subr.mxu0 0.0
    %626 = vmatpush1.msra.mxu0 0.0
    %627 = vmatprep.subr.mxu0 0.0
    %628 = vmatpush1.msra.mxu0 0.0
    %629 = vmatprep.subr.mxu0 0.0
    %630 = vmatpush1.msra.mxu0 0.0
    %631 = vmatprep.subr.mxu0 0.0
    %632 = vmatpush1.msra.mxu0 0.0
    %633 = vmatprep.subr.mxu0 0.0
    %634 = vmatpush1.msra.mxu0 0.0
    %635 = vmatprep.subr.mxu0 0.0
    %636 = vmatpush1.msra.mxu0 0.0
    %637 = vmatprep.subr.mxu0 0.0
    %638 = vmatpush1.msra.mxu0 0.0
    %639 = vmatprep.subr.mxu0 0.0
    %640 = vmatpush1.msra.mxu0 0.0
    %641 = vmatprep.subr.mxu0 0.0
    %642 = vmatpush1.msra.mxu0 0.0
    %643 = vmatprep.subr.mxu0 0.0
    %644 = vmatpush1.msra.mxu0 0.0
    %645 = vmatprep.subr.mxu0 0.0
    %646 = vmatpush1.msra.mxu0 0.0
    %647 = vmatprep.subr.mxu0 0.0
    %648 = vmatpush1.msra.mxu0 0.0
    %649 = vmatprep.mubr.f32.mxu0 0.0
    %650 = vmatmul.mubr.f32.gmra.mrb[0].mxu0 %v583
    %v651 = vpop.f32.mrb[0].mxu0
    %v652 = vadd.f32 0.0, %v651
    %v653 = vpop.f32.mrb[0].mxu0
    %v654 = vadd.f32 0.0, %v653
    %655 = vdwg.mxu0
    %v656 = vadd.f32 %v652, %v261
    %v657 = vxor.u32 %v656, 2147483648
    %v658 = vmul.f32 %v657, 1.442695
    %v659 = vpow.pop %v658
    %v660 = vadd.f32 %v659, 1.0
    %v661 = vrcp.pop %v660
    %v662 = vmul.f32 1.0, %v661
    %v663 = vtanh.pop %v656
    %v664 = vmul.f32 %v662, %v534
    %666 = vrot.lane.b32.xlu0 %v663, 64
    %v667 = vpop.permute.xlu0 %666
    %v669 = vmul.f32 %v662, %v667
    %671 = vrot.lane.b32.xlu0 %v669, 32
    %v672 = vpop.permute.xlu0 %671
    %v674 = vadd.f32 %v664, %v672
    %v675 = vtanh.pop %v674
    %677 = vrot.lane.b32.xlu0 %v675, 64
    %v678 = vpop.permute.xlu0 %677
    %v680 = vmul.f32 %v662, %v678
    %v681 = vadd.f32 %v214, %v654
    %v682 = vxor.u32 %v681, 2147483648
    %v683 = vmul.f32 %v682, 1.442695
    %v684 = vpow.pop %v683
    %v685 = vadd.f32 %v684, 1.0
    %v686 = vrcp.pop %v685
    %v687 = vmul.f32 1.0, %v686
    %v688 = vtanh.pop %v681
    %v689 = vmul.f32 %v687, %v559
    %691 = vrot.lane.b32.xlu0 %v688, 64
    %v692 = vpop.permute.xlu0 %691
    %v694 = vmul.f32 %v687, %v692
    %696 = vrot.lane.b32.xlu0 %v694, 32
    %v697 = vpop.permute.xlu0 %696
    %v699 = vadd.f32 %v689, %v697
    %v700 = vtanh.pop %v699
    %702 = vrot.lane.b32.xlu0 %v700, 64
    %v703 = vpop.permute.xlu0 %702
    %v705 = vmul.f32 %v687, %v703
    %v708 = vunpack.c.l.s4 1983009808
    %v709 = vunpack.c.0.s8 %v708
    %v710 = vlaneseq
    %v711 = vshrl.u32 %v710, 7
    %v712 = vsub.s32 %v709, %v711
    %v713 = vrot.slane %v705, %v712
    %714 = vrot.lane.b32.xlu0 %v713, 32
    %v715 = vpop.permute.xlu0 %714
    %718 = vrot.lane.b32.xlu0 %v680, 64
    %v719 = vpop.permute.xlu0 %718
    %v721 = vsel %vm299, %v715, %v719
    %v723 = vsel %vm301, %v721, 0
    %725 = vmatprep.subr.mxu0 %v241
    %726 = vmatpush1.msra.mxu0 %v240
    %727 = vmatprep.subr.mxu0 %v243
    %728 = vmatpush1.msra.mxu0 %v242
    %729 = vmatprep.subr.mxu0 %v245
    %730 = vmatpush1.msra.mxu0 %v244
    %731 = vmatprep.subr.mxu0 %v247
    %732 = vmatpush1.msra.mxu0 %v246
    %733 = vmatprep.subr.mxu0 %v249
    %734 = vmatpush1.msra.mxu0 %v248
    %735 = vmatprep.subr.mxu0 %v251
    %736 = vmatpush1.msra.mxu0 %v250
    %737 = vmatprep.subr.mxu0 %v253
    %738 = vmatpush1.msra.mxu0 %v252
    %739 = vmatprep.subr.mxu0 %v255
    %740 = vmatpush1.msra.mxu0 %v254
    %741 = vmatprep.subr.mxu0 0.0
    %742 = vmatpush1.msra.mxu0 0.0
    %743 = vmatprep.subr.mxu0 0.0
    %744 = vmatpush1.msra.mxu0 0.0
    %745 = vmatprep.subr.mxu0 0.0
    %746 = vmatpush1.msra.mxu0 0.0
    %747 = vmatprep.subr.mxu0 0.0
    %748 = vmatpush1.msra.mxu0 0.0
    %749 = vmatprep.subr.mxu0 0.0
    %750 = vmatpush1.msra.mxu0 0.0
    %751 = vmatprep.subr.mxu0 0.0
    %752 = vmatpush1.msra.mxu0 0.0
    %753 = vmatprep.subr.mxu0 0.0
    %754 = vmatpush1.msra.mxu0 0.0
    %755 = vmatprep.subr.mxu0 0.0
    %756 = vmatpush1.msra.mxu0 0.0
    %757 = vmatprep.subr.mxu0 0.0
    %758 = vmatpush1.msra.mxu0 0.0
    %759 = vmatprep.subr.mxu0 0.0
    %760 = vmatpush1.msra.mxu0 0.0
    %761 = vmatprep.subr.mxu0 0.0
    %762 = vmatpush1.msra.mxu0 0.0
    %763 = vmatprep.subr.mxu0 0.0
    %764 = vmatpush1.msra.mxu0 0.0
    %765 = vmatprep.subr.mxu0 0.0
    %766 = vmatpush1.msra.mxu0 0.0
    %767 = vmatprep.subr.mxu0 0.0
    %768 = vmatpush1.msra.mxu0 0.0
    %769 = vmatprep.subr.mxu0 0.0
    %770 = vmatpush1.msra.mxu0 0.0
    %771 = vmatprep.subr.mxu0 0.0
    %772 = vmatpush1.msra.mxu0 0.0
    %773 = vmatprep.subr.mxu0 0.0
    %774 = vmatpush1.msra.mxu0 0.0
    %775 = vmatprep.subr.mxu0 0.0
    %776 = vmatpush1.msra.mxu0 0.0
    %777 = vmatprep.subr.mxu0 0.0
    %778 = vmatpush1.msra.mxu0 0.0
    %779 = vmatprep.subr.mxu0 0.0
    %780 = vmatpush1.msra.mxu0 0.0
    %781 = vmatprep.subr.mxu0 0.0
    %782 = vmatpush1.msra.mxu0 0.0
    %783 = vmatprep.subr.mxu0 0.0
    %784 = vmatpush1.msra.mxu0 0.0
    %785 = vmatprep.subr.mxu0 0.0
    %786 = vmatpush1.msra.mxu0 0.0
    %787 = vmatprep.subr.mxu0 0.0
    %788 = vmatpush1.msra.mxu0 0.0
    %789 = vmatprep.mubr.f32.mxu0 0.0
    %790 = vmatmul.mubr.f32.gmra.mrb[0].mxu0 %v723
    %v791 = vpop.f32.mrb[0].mxu0
    %v792 = vadd.f32 0.0, %v791
    %v793 = vpop.f32.mrb[0].mxu0
    %v794 = vadd.f32 0.0, %v793
    %795 = vdwg.mxu0
    %v796 = vadd.f32 %v792, %v261
    %v797 = vxor.u32 %v796, 2147483648
    %v798 = vmul.f32 %v797, 1.442695
    %v799 = vpow.pop %v798
    %v800 = vadd.f32 %v799, 1.0
    %v801 = vrcp.pop %v800
    %v802 = vmul.f32 1.0, %v801
    %v803 = vtanh.pop %v796
    %v804 = vmul.f32 %v802, %v674
    %806 = vrot.lane.b32.xlu0 %v803, 64
    %v807 = vpop.permute.xlu0 %806
    %v809 = vmul.f32 %v802, %v807
    %811 = vrot.lane.b32.xlu0 %v809, 32
    %v812 = vpop.permute.xlu0 %811
    %v814 = vadd.f32 %v804, %v812
    %v815 = vtanh.pop %v814
    %817 = vrot.lane.b32.xlu0 %v815, 64
    %v818 = vpop.permute.xlu0 %817
    %v820 = vmul.f32 %v802, %v818
    %v821 = vadd.f32 %v222, %v794
    %v822 = vxor.u32 %v821, 2147483648
    %v823 = vmul.f32 %v822, 1.442695
    %v824 = vpow.pop %v823
    %v825 = vadd.f32 %v824, 1.0
    %v826 = vrcp.pop %v825
    %v827 = vmul.f32 1.0, %v826
    %v828 = vtanh.pop %v821
    %v829 = vmul.f32 %v827, %v699
    %831 = vrot.lane.b32.xlu0 %v828, 64
    %v832 = vpop.permute.xlu0 %831
    %v834 = vmul.f32 %v827, %v832
    %836 = vrot.lane.b32.xlu0 %v834, 32
    %v837 = vpop.permute.xlu0 %836
    %v839 = vadd.f32 %v829, %v837
    %v840 = vtanh.pop %v839
    %842 = vrot.lane.b32.xlu0 %v840, 64
    %v843 = vpop.permute.xlu0 %842
    %v845 = vmul.f32 %v827, %v843
    %v848 = vunpack.c.l.s4 1983009808
    %v849 = vunpack.c.0.s8 %v848
    %v850 = vlaneseq
    %v851 = vshrl.u32 %v850, 7
    %v852 = vsub.s32 %v849, %v851
    %v853 = vrot.slane %v845, %v852
    %854 = vrot.lane.b32.xlu0 %v853, 32
    %v855 = vpop.permute.xlu0 %854
    %858 = vrot.lane.b32.xlu0 %v820, 64
    %v859 = vpop.permute.xlu0 %858
    %v861 = vsel %vm299, %v855, %v859
    %v863 = vsel %vm301, %v861, 0
    %865 = vmatprep.subr.mxu0 %v241
    %866 = vmatpush1.msra.mxu0 %v240
    %867 = vmatprep.subr.mxu0 %v243
    %868 = vmatpush1.msra.mxu0 %v242
    %869 = vmatprep.subr.mxu0 %v245
    %870 = vmatpush1.msra.mxu0 %v244
    %871 = vmatprep.subr.mxu0 %v247
    %872 = vmatpush1.msra.mxu0 %v246
    %873 = vmatprep.subr.mxu0 %v249
    %874 = vmatpush1.msra.mxu0 %v248
    %875 = vmatprep.subr.mxu0 %v251
    %876 = vmatpush1.msra.mxu0 %v250
    %877 = vmatprep.subr.mxu0 %v253
    %878 = vmatpush1.msra.mxu0 %v252
    %879 = vmatprep.subr.mxu0 %v255
    %880 = vmatpush1.msra.mxu0 %v254
    %881 = vmatprep.subr.mxu0 0.0
    %882 = vmatpush1.msra.mxu0 0.0
    %883 = vmatprep.subr.mxu0 0.0
    %884 = vmatpush1.msra.mxu0 0.0
    %885 = vmatprep.subr.mxu0 0.0
    %886 = vmatpush1.msra.mxu0 0.0
    %887 = vmatprep.subr.mxu0 0.0
    %888 = vmatpush1.msra.mxu0 0.0
    %889 = vmatprep.subr.mxu0 0.0
    %890 = vmatpush1.msra.mxu0 0.0
    %891 = vmatprep.subr.mxu0 0.0
    %892 = vmatpush1.msra.mxu0 0.0
    %893 = vmatprep.subr.mxu0 0.0
    %894 = vmatpush1.msra.mxu0 0.0
    %895 = vmatprep.subr.mxu0 0.0
    %896 = vmatpush1.msra.mxu0 0.0
    %897 = vmatprep.subr.mxu0 0.0
    %898 = vmatpush1.msra.mxu0 0.0
    %899 = vmatprep.subr.mxu0 0.0
    %900 = vmatpush1.msra.mxu0 0.0
    %901 = vmatprep.subr.mxu0 0.0
    %902 = vmatpush1.msra.mxu0 0.0
    %903 = vmatprep.subr.mxu0 0.0
    %904 = vmatpush1.msra.mxu0 0.0
    %905 = vmatprep.subr.mxu0 0.0
    %906 = vmatpush1.msra.mxu0 0.0
    %907 = vmatprep.subr.mxu0 0.0
    %908 = vmatpush1.msra.mxu0 0.0
    %909 = vmatprep.subr.mxu0 0.0
    %910 = vmatpush1.msra.mxu0 0.0
    %911 = vmatprep.subr.mxu0 0.0
    %912 = vmatpush1.msra.mxu0 0.0
    %913 = vmatprep.subr.mxu0 0.0
    %914 = vmatpush1.msra.mxu0 0.0
    %915 = vmatprep.subr.mxu0 0.0
    %916 = vmatpush1.msra.mxu0 0.0
    %917 = vmatprep.subr.mxu0 0.0
    %918 = vmatpush1.msra.mxu0 0.0
    %919 = vmatprep.subr.mxu0 0.0
    %920 = vmatpush1.msra.mxu0 0.0
    %921 = vmatprep.subr.mxu0 0.0
    %922 = vmatpush1.msra.mxu0 0.0
    %923 = vmatprep.subr.mxu0 0.0
    %924 = vmatpush1.msra.mxu0 0.0
    %925 = vmatprep.subr.mxu0 0.0
    %926 = vmatpush1.msra.mxu0 0.0
    %927 = vmatprep.subr.mxu0 0.0
    %928 = vmatpush1.msra.mxu0 0.0
    %929 = vmatprep.mubr.f32.mxu0 0.0
    %930 = vmatmul.mubr.f32.gmra.mrb[0].mxu0 %v863
    %v931 = vpop.f32.mrb[0].mxu0
    %v932 = vadd.f32 0.0, %v931
    %v933 = vpop.f32.mrb[0].mxu0
    %v934 = vadd.f32 0.0, %v933
    %935 = vdwg.mxu0
    %v936 = vadd.f32 %v932, %v261
    %v937 = vxor.u32 %v936, 2147483648
    %v938 = vmul.f32 %v937, 1.442695
    %v939 = vpow.pop %v938
    %v940 = vadd.f32 %v939, 1.0
    %v941 = vrcp.pop %v940
    %v942 = vmul.f32 1.0, %v941
    %v943 = vtanh.pop %v936
    %v944 = vmul.f32 %v942, %v814
    %946 = vrot.lane.b32.xlu0 %v943, 64
    %v947 = vpop.permute.xlu0 %946
    %v949 = vmul.f32 %v942, %v947
    %951 = vrot.lane.b32.xlu0 %v949, 32
    %v952 = vpop.permute.xlu0 %951
    %v954 = vadd.f32 %v944, %v952
    %v955 = vtanh.pop %v954
    %957 = vrot.lane.b32.xlu0 %v955, 64
    %v958 = vpop.permute.xlu0 %957
    %v960 = vmul.f32 %v942, %v958
    %v961 = vadd.f32 %v230, %v934
    %v962 = vxor.u32 %v961, 2147483648
    %v963 = vmul.f32 %v962, 1.442695
    %v964 = vpow.pop %v963
    %v965 = vadd.f32 %v964, 1.0
    %v966 = vrcp.pop %v965
    %v967 = vmul.f32 1.0, %v966
    %v968 = vtanh.pop %v961
    %v969 = vmul.f32 %v967, %v839
    %971 = vrot.lane.b32.xlu0 %v968, 64
    %v972 = vpop.permute.xlu0 %971
    %v974 = vmul.f32 %v967, %v972
    %976 = vrot.lane.b32.xlu0 %v974, 32
    %v977 = vpop.permute.xlu0 %976
    %v979 = vadd.f32 %v969, %v977
    %v980 = vtanh.pop %v979
    %982 = vrot.lane.b32.xlu0 %v980, 64
    %v983 = vpop.permute.xlu0 %982
    %v985 = vmul.f32 %v967, %v983
    %v988 = vunpack.c.l.s4 1983009808
    %v989 = vunpack.c.0.s8 %v988
    %v990 = vlaneseq
    %v991 = vshrl.u32 %v990, 7
    %v992 = vsub.s32 %v989, %v991
    %v993 = vrot.slane %v985, %v992
    %994 = vrot.lane.b32.xlu0 %v993, 32
    %v995 = vpop.permute.xlu0 %994
    %998 = vrot.lane.b32.xlu0 %v960, 64
    %v999 = vpop.permute.xlu0 %998
    %v1001 = vsel %vm299, %v995, %v999
    %v1003 = vsel %vm301, %v1001, 0
    %1005 = vmatprep.subr.mxu0 %v241
    %1006 = vmatpush1.msra.mxu0 %v240
    %1007 = vmatprep.subr.mxu0 %v243
    %1008 = vmatpush1.msra.mxu0 %v242
    %1009 = vmatprep.subr.mxu0 %v245
    %1010 = vmatpush1.msra.mxu0 %v244
    %1011 = vmatprep.subr.mxu0 %v247
    %1012 = vmatpush1.msra.mxu0 %v246
    %1013 = vmatprep.subr.mxu0 %v249
    %1014 = vmatpush1.msra.mxu0 %v248
    %1015 = vmatprep.subr.mxu0 %v251
    %1016 = vmatpush1.msra.mxu0 %v250
    %1017 = vmatprep.subr.mxu0 %v253
    %1018 = vmatpush1.msra.mxu0 %v252
    %1019 = vmatprep.subr.mxu0 %v255
    %1020 = vmatpush1.msra.mxu0 %v254
    %1021 = vmatprep.subr.mxu0 0.0
    %1022 = vmatpush1.msra.mxu0 0.0
    %1023 = vmatprep.subr.mxu0 0.0
    %1024 = vmatpush1.msra.mxu0 0.0
    %1025 = vmatprep.subr.mxu0 0.0
    %1026 = vmatpush1.msra.mxu0 0.0
    %1027 = vmatprep.subr.mxu0 0.0
    %1028 = vmatpush1.msra.mxu0 0.0
    %1029 = vmatprep.subr.mxu0 0.0
    %1030 = vmatpush1.msra.mxu0 0.0
    %1031 = vmatprep.subr.mxu0 0.0
    %1032 = vmatpush1.msra.mxu0 0.0
    %1033 = vmatprep.subr.mxu0 0.0
    %1034 = vmatpush1.msra.mxu0 0.0
    %1035 = vmatprep.subr.mxu0 0.0
    %1036 = vmatpush1.msra.mxu0 0.0
    %1037 = vmatprep.subr.mxu0 0.0
    %1038 = vmatpush1.msra.mxu0 0.0
    %1039 = vmatprep.subr.mxu0 0.0
    %1040 = vmatpush1.msra.mxu0 0.0
    %1041 = vmatprep.subr.mxu0 0.0
    %1042 = vmatpush1.msra.mxu0 0.0
    %1043 = vmatprep.subr.mxu0 0.0
    %1044 = vmatpush1.msra.mxu0 0.0
    %1045 = vmatprep.subr.mxu0 0.0
    %1046 = vmatpush1.msra.mxu0 0.0
    %1047 = vmatprep.subr.mxu0 0.0
    %1048 = vmatpush1.msra.mxu0 0.0
    %1049 = vmatprep.subr.mxu0 0.0
    %1050 = vmatpush1.msra.mxu0 0.0
    %1051 = vmatprep.subr.mxu0 0.0
    %1052 = vmatpush1.msra.mxu0 0.0
    %1053 = vmatprep.subr.mxu0 0.0
    %1054 = vmatpush1.msra.mxu0 0.0
    %1055 = vmatprep.subr.mxu0 0.0
    %1056 = vmatpush1.msra.mxu0 0.0
    %1057 = vmatprep.subr.mxu0 0.0
    %1058 = vmatpush1.msra.mxu0 0.0
    %1059 = vmatprep.subr.mxu0 0.0
    %1060 = vmatpush1.msra.mxu0 0.0
    %1061 = vmatprep.subr.mxu0 0.0
    %1062 = vmatpush1.msra.mxu0 0.0
    %1063 = vmatprep.subr.mxu0 0.0
    %1064 = vmatpush1.msra.mxu0 0.0
    %1065 = vmatprep.subr.mxu0 0.0
    %1066 = vmatpush1.msra.mxu0 0.0
    %1067 = vmatprep.subr.mxu0 0.0
    %1068 = vmatpush1.msra.mxu0 0.0
    %1069 = vmatprep.mubr.f32.mxu0 0.0
    %1070 = vmatmul.mubr.f32.gmra.mrb[0].mxu0 %v1003
    %v1071 = vpop.f32.mrb[0].mxu0
    %v1072 = vadd.f32 0.0, %v1071
    %v1073 = vpop.f32.mrb[0].mxu0
    %v1074 = vadd.f32 0.0, %v1073
    %1075 = vdwg.mxu0
    %v1076 = vadd.f32 %v1072, %v261
    %v1077 = vxor.u32 %v1076, 2147483648
    %v1078 = vmul.f32 %v1077, 1.442695
    %v1079 = vpow.pop %v1078
    %v1080 = vadd.f32 %v1079, 1.0
    %v1081 = vrcp.pop %v1080
    %v1082 = vmul.f32 1.0, %v1081
    %v1083 = vtanh.pop %v1076
    %v1084 = vmul.f32 %v1082, %v954
    %1086 = vrot.lane.b32.xlu0 %v1083, 64
    %v1087 = vpop.permute.xlu0 %1086
    %v1089 = vmul.f32 %v1082, %v1087
    %1091 = vrot.lane.b32.xlu0 %v1089, 32
    %v1092 = vpop.permute.xlu0 %1091
    %v1094 = vadd.f32 %v1084, %v1092
    %v1095 = vtanh.pop %v1094
    %1097 = vrot.lane.b32.xlu0 %v1095, 64
    %v1098 = vpop.permute.xlu0 %1097
    %v1100 = vmul.f32 %v1082, %v1098
    %v1101 = vadd.f32 %v229, %v1074
    %v1102 = vxor.u32 %v1101, 2147483648
    %v1103 = vmul.f32 %v1102, 1.442695
    %v1104 = vpow.pop %v1103
    %v1105 = vadd.f32 %v1104, 1.0
    %v1106 = vrcp.pop %v1105
    %v1107 = vmul.f32 1.0, %v1106
    %v1108 = vtanh.pop %v1101
    %v1109 = vmul.f32 %v1107, %v979
    %1111 = vrot.lane.b32.xlu0 %v1108, 64
    %v1112 = vpop.permute.xlu0 %1111
    %v1114 = vmul.f32 %v1107, %v1112
    %1116 = vrot.lane.b32.xlu0 %v1114, 32
    %v1117 = vpop.permute.xlu0 %1116
    %v1119 = vadd.f32 %v1109, %v1117
    %v1120 = vtanh.pop %v1119
    %1122 = vrot.lane.b32.xlu0 %v1120, 64
    %v1123 = vpop.permute.xlu0 %1122
    %v1125 = vmul.f32 %v1107, %v1123
    %v1128 = vunpack.c.l.s4 1983009808
    %v1129 = vunpack.c.0.s8 %v1128
    %v1130 = vlaneseq
    %v1131 = vshrl.u32 %v1130, 7
    %v1132 = vsub.s32 %v1129, %v1131
    %v1133 = vrot.slane %v1125, %v1132
    %1134 = vrot.lane.b32.xlu0 %v1133, 32
    %v1135 = vpop.permute.xlu0 %1134
    %1138 = vrot.lane.b32.xlu0 %v1100, 64
    %v1139 = vpop.permute.xlu0 %1138
    %v1141 = vsel %vm299, %v1135, %v1139
    %v1143 = vsel %vm301, %v1141, 0
    %1145 = vmatprep.subr.mxu0 %v241
    %1146 = vmatpush1.msra.mxu0 %v240
    %1147 = vmatprep.subr.mxu0 %v243
    %1148 = vmatpush1.msra.mxu0 %v242
    %1149 = vmatprep.subr.mxu0 %v245
    %1150 = vmatpush1.msra.mxu0 %v244
    %1151 = vmatprep.subr.mxu0 %v247
    %1152 = vmatpush1.msra.mxu0 %v246
    %1153 = vmatprep.subr.mxu0 %v249
    %1154 = vmatpush1.msra.mxu0 %v248
    %1155 = vmatprep.subr.mxu0 %v251
    %1156 = vmatpush1.msra.mxu0 %v250
    %1157 = vmatprep.subr.mxu0 %v253
    %1158 = vmatpush1.msra.mxu0 %v252
    %1159 = vmatprep.subr.mxu0 %v255
    %1160 = vmatpush1.msra.mxu0 %v254
    %1161 = vmatprep.subr.mxu0 0.0
    %1162 = vmatpush1.msra.mxu0 0.0
    %1163 = vmatprep.subr.mxu0 0.0
    %1164 = vmatpush1.msra.mxu0 0.0
    %1165 = vmatprep.subr.mxu0 0.0
    %1166 = vmatpush1.msra.mxu0 0.0
    %1167 = vmatprep.subr.mxu0 0.0
    %1168 = vmatpush1.msra.mxu0 0.0
    %1169 = vmatprep.subr.mxu0 0.0
    %1170 = vmatpush1.msra.mxu0 0.0
    %1171 = vmatprep.subr.mxu0 0.0
    %1172 = vmatpush1.msra.mxu0 0.0
    %1173 = vmatprep.subr.mxu0 0.0
    %1174 = vmatpush1.msra.mxu0 0.0
    %1175 = vmatprep.subr.mxu0 0.0
    %1176 = vmatpush1.msra.mxu0 0.0
    %1177 = vmatprep.subr.mxu0 0.0
    %1178 = vmatpush1.msra.mxu0 0.0
    %1179 = vmatprep.subr.mxu0 0.0
    %1180 = vmatpush1.msra.mxu0 0.0
    %1181 = vmatprep.subr.mxu0 0.0
    %1182 = vmatpush1.msra.mxu0 0.0
    %1183 = vmatprep.subr.mxu0 0.0
    %1184 = vmatpush1.msra.mxu0 0.0
    %1185 = vmatprep.subr.mxu0 0.0
    %1186 = vmatpush1.msra.mxu0 0.0
    %1187 = vmatprep.subr.mxu0 0.0
    %1188 = vmatpush1.msra.mxu0 0.0
    %1189 = vmatprep.subr.mxu0 0.0
    %1190 = vmatpush1.msra.mxu0 0.0
    %1191 = vmatprep.subr.mxu0 0.0
    %1192 = vmatpush1.msra.mxu0 0.0
    %1193 = vmatprep.subr.mxu0 0.0
    %1194 = vmatpush1.msra.mxu0 0.0
    %1195 = vmatprep.subr.mxu0 0.0
    %1196 = vmatpush1.msra.mxu0 0.0
    %1197 = vmatprep.subr.mxu0 0.0
    %1198 = vmatpush1.msra.mxu0 0.0
    %1199 = vmatprep.subr.mxu0 0.0
    %1200 = vmatpush1.msra.mxu0 0.0
    %1201 = vmatprep.subr.mxu0 0.0
    %1202 = vmatpush1.msra.mxu0 0.0
    %1203 = vmatprep.subr.mxu0 0.0
    %1204 = vmatpush1.msra.mxu0 0.0
    %1205 = vmatprep.subr.mxu0 0.0
    %1206 = vmatpush1.msra.mxu0 0.0
    %1207 = vmatprep.subr.mxu0 0.0
    %1208 = vmatpush1.msra.mxu0 0.0
    %1209 = vmatprep.mubr.f32.mxu0 0.0
    %1210 = vmatmul.mubr.f32.gmra.mrb[0].mxu0 %v1143
    %v1211 = vpop.f32.mrb[0].mxu0
    %v1212 = vadd.f32 0.0, %v1211
    %v1213 = vpop.f32.mrb[0].mxu0
    %v1214 = vadd.f32 0.0, %v1213
    %1215 = vdwg.mxu0
    %v1216 = vadd.f32 %v1212, %v261
    %v1217 = vxor.u32 %v1216, 2147483648
    %v1218 = vmul.f32 %v1217, 1.442695
    %v1219 = vpow.pop %v1218
    %v1220 = vadd.f32 %v1219, 1.0
    %v1221 = vrcp.pop %v1220
    %v1222 = vmul.f32 1.0, %v1221
    %v1223 = vtanh.pop %v1216
    %v1224 = vmul.f32 %v1222, %v1094
    %1226 = vrot.lane.b32.xlu0 %v1223, 64
    %v1227 = vpop.permute.xlu0 %1226
    %v1229 = vmul.f32 %v1222, %v1227
    %1231 = vrot.lane.b32.xlu0 %v1229, 32
    %v1232 = vpop.permute.xlu0 %1231
    %v1234 = vadd.f32 %v1224, %v1232
    %v1235 = vtanh.pop %v1234
    %1237 = vrot.lane.b32.xlu0 %v1235, 64
    %v1238 = vpop.permute.xlu0 %1237
    %v1240 = vmul.f32 %v1222, %v1238
    %v1241 = vadd.f32 %v231, %v1214
    %v1242 = vxor.u32 %v1241, 2147483648
    %v1243 = vmul.f32 %v1242, 1.442695
    %v1244 = vpow.pop %v1243
    %v1245 = vadd.f32 %v1244, 1.0
    %v1246 = vrcp.pop %v1245
    %v1247 = vmul.f32 1.0, %v1246
    %v1248 = vtanh.pop %v1241
    %v1249 = vmul.f32 %v1247, %v1119
    %1251 = vrot.lane.b32.xlu0 %v1248, 64
    %v1252 = vpop.permute.xlu0 %1251
    %v1254 = vmul.f32 %v1247, %v1252
    %1256 = vrot.lane.b32.xlu0 %v1254, 32
    %v1257 = vpop.permute.xlu0 %1256
    %v1259 = vadd.f32 %v1249, %v1257
    %v1260 = vtanh.pop %v1259
    %1262 = vrot.lane.b32.xlu0 %v1260, 64
    %v1263 = vpop.permute.xlu0 %1262
    %v1265 = vmul.f32 %v1247, %v1263
    %v1268 = vunpack.c.l.s4 1983009808
    %v1269 = vunpack.c.0.s8 %v1268
    %v1270 = vlaneseq
    %v1271 = vshrl.u32 %v1270, 7
    %v1272 = vsub.s32 %v1269, %v1271
    %v1273 = vrot.slane %v1265, %v1272
    %1274 = vrot.lane.b32.xlu0 %v1273, 32
    %v1275 = vpop.permute.xlu0 %1274
    %1278 = vrot.lane.b32.xlu0 %v1240, 64
    %v1279 = vpop.permute.xlu0 %1278
    %v1281 = vsel %vm299, %v1275, %v1279
    %v1283 = vsel %vm301, %v1281, 0
    %1285 = vmatprep.subr.mxu0 %v241
    %1286 = vmatpush1.msra.mxu0 %v240
    %1287 = vmatprep.subr.mxu0 %v243
    %1288 = vmatpush1.msra.mxu0 %v242
    %1289 = vmatprep.subr.mxu0 %v245
    %1290 = vmatpush1.msra.mxu0 %v244
    %1291 = vmatprep.subr.mxu0 %v247
    %1292 = vmatpush1.msra.mxu0 %v246
    %1293 = vmatprep.subr.mxu0 %v249
    %1294 = vmatpush1.msra.mxu0 %v248
    %1295 = vmatprep.subr.mxu0 %v251
    %1296 = vmatpush1.msra.mxu0 %v250
    %1297 = vmatprep.subr.mxu0 %v253
    %1298 = vmatpush1.msra.mxu0 %v252
    %1299 = vmatprep.subr.mxu0 %v255
    %1300 = vmatpush1.msra.mxu0 %v254
    %1301 = vmatprep.subr.mxu0 0.0
    %1302 = vmatpush1.msra.mxu0 0.0
    %1303 = vmatprep.subr.mxu0 0.0
    %1304 = vmatpush1.msra.mxu0 0.0
    %1305 = vmatprep.subr.mxu0 0.0
    %1306 = vmatpush1.msra.mxu0 0.0
    %1307 = vmatprep.subr.mxu0 0.0
    %1308 = vmatpush1.msra.mxu0 0.0
    %1309 = vmatprep.subr.mxu0 0.0
    %1310 = vmatpush1.msra.mxu0 0.0
    %1311 = vmatprep.subr.mxu0 0.0
    %1312 = vmatpush1.msra.mxu0 0.0
    %1313 = vmatprep.subr.mxu0 0.0
    %1314 = vmatpush1.msra.mxu0 0.0
    %1315 = vmatprep.subr.mxu0 0.0
    %1316 = vmatpush1.msra.mxu0 0.0
    %1317 = vmatprep.subr.mxu0 0.0
    %1318 = vmatpush1.msra.mxu0 0.0
    %1319 = vmatprep.subr.mxu0 0.0
    %1320 = vmatpush1.msra.mxu0 0.0
    %1321 = vmatprep.subr.mxu0 0.0
    %1322 = vmatpush1.msra.mxu0 0.0
    %1323 = vmatprep.subr.mxu0 0.0
    %1324 = vmatpush1.msra.mxu0 0.0
    %1325 = vmatprep.subr.mxu0 0.0
    %1326 = vmatpush1.msra.mxu0 0.0
    %1327 = vmatprep.subr.mxu0 0.0
    %1328 = vmatpush1.msra.mxu0 0.0
    %1329 = vmatprep.subr.mxu0 0.0
    %1330 = vmatpush1.msra.mxu0 0.0
    %1331 = vmatprep.subr.mxu0 0.0
    %1332 = vmatpush1.msra.mxu0 0.0
    %1333 = vmatprep.subr.mxu0 0.0
    %1334 = vmatpush1.msra.mxu0 0.0
    %1335 = vmatprep.subr.mxu0 0.0
    %1336 = vmatpush1.msra.mxu0 0.0
    %1337 = vmatprep.subr.mxu0 0.0
    %1338 = vmatpush1.msra.mxu0 0.0
    %1339 = vmatprep.subr.mxu0 0.0
    %1340 = vmatpush1.msra.mxu0 0.0
    %1341 = vmatprep.subr.mxu0 0.0
    %1342 = vmatpush1.msra.mxu0 0.0
    %1343 = vmatprep.subr.mxu0 0.0
    %1344 = vmatpush1.msra.mxu0 0.0
    %1345 = vmatprep.subr.mxu0 0.0
    %1346 = vmatpush1.msra.mxu0 0.0
    %1347 = vmatprep.subr.mxu0 0.0
    %1348 = vmatpush1.msra.mxu0 0.0
    %1349 = vmatprep.mubr.f32.mxu0 0.0
    %1350 = vmatmul.mubr.f32.gmra.mrb[0].mxu0 %v1283
    %v1351 = vpop.f32.mrb[0].mxu0
    %v1352 = vadd.f32 0.0, %v1351
    %v1353 = vpop.f32.mrb[0].mxu0
    %1354 = vdwg.mxu0
    %v1355 = vadd.f32 %v1352, %v261
    %v1356 = vxor.u32 %v1355, 2147483648
    %v1357 = vmul.f32 %v1356, 1.442695
    %v1358 = vpow.pop %v1357
    %v1359 = vadd.f32 %v1358, 1.0
    %v1360 = vrcp.pop %v1359
    %v1361 = vmul.f32 1.0, %v1360
    %v1362 = vtanh.pop %v1355
    %v1363 = vmul.f32 %v1361, %v1234
    %1365 = vrot.lane.b32.xlu0 %v1362, 64
    %v1366 = vpop.permute.xlu0 %1365
    %v1368 = vmul.f32 %v1361, %v1366
    %1370 = vrot.lane.b32.xlu0 %v1368, 32
    %v1371 = vpop.permute.xlu0 %1370
    %v1373 = vadd.f32 %v1363, %v1371
    %v1374 = vtanh.pop %v1373
    %1376 = vrot.lane.b32.xlu0 %v1374, 64
    %v1377 = vpop.permute.xlu0 %1376
    %v1379 = vmul.f32 %v1361, %v1377
    %1381 = vrot.lane.b32.xlu0 %v1379, 64
    %v1382 = vpop.permute.xlu0 %1381
    %v1384 = vsel %vm299, %v1275, %v1382
    %v1385 = vld [vmem:[#allocation4] sm:$0xff]
    %v1386 = vld [vmem:[#allocation4 + $0x8] sm:$0xff]
    %v1387 = vld [vmem:[#allocation4 + $0x10] sm:$0xff]
    %v1388 = vld [vmem:[#allocation4 + $0x18] sm:$0xff]
    %v1389 = vld [vmem:[#allocation4 + $0x20] sm:$0xff]
    %v1390 = vld [vmem:[#allocation4 + $0x28] sm:$0xff]
    %v1391 = vld [vmem:[#allocation4 + $0x30] sm:$0xff]
    %v1392 = vld [vmem:[#allocation4 + $0x38] sm:$0xff]
    %v1393 = vld [vmem:[%s6] sm:$0x1]
    %v1395 = vlaneseq
    %v1396 = vshrl.u32 %v1395, 7
    %v1397 = vsub.s32 0, %v1396
    %v1398 = vrot.slane %v1393, %v1397
    %v1401 = vsel %vm301, %v1384, 0
    %1403 = vmatprep.subr.mxu0 0.0
    %1404 = vmatpush1.msra.mxu0 %v1385
    %1405 = vmatprep.subr.mxu0 0.0
    %1406 = vmatpush1.msra.mxu0 %v1386
    %1407 = vmatprep.subr.mxu0 0.0
    %1408 = vmatpush1.msra.mxu0 %v1387
    %1409 = vmatprep.subr.mxu0 0.0
    %1410 = vmatpush1.msra.mxu0 %v1388
    %1411 = vmatprep.subr.mxu0 0.0
    %1412 = vmatpush1.msra.mxu0 %v1389
    %1413 = vmatprep.subr.mxu0 0.0
    %1414 = vmatpush1.msra.mxu0 %v1390
    %1415 = vmatprep.subr.mxu0 0.0
    %1416 = vmatpush1.msra.mxu0 %v1391
    %1417 = vmatprep.subr.mxu0 0.0
    %1418 = vmatpush1.msra.mxu0 %v1392
    %1419 = vmatprep.subr.mxu0 0.0
    %1420 = vmatpush1.msra.mxu0 0.0
    %1421 = vmatprep.subr.mxu0 0.0
    %1422 = vmatpush1.msra.mxu0 0.0
    %1423 = vmatprep.subr.mxu0 0.0
    %1424 = vmatpush1.msra.mxu0 0.0
    %1425 = vmatprep.subr.mxu0 0.0
    %1426 = vmatpush1.msra.mxu0 0.0
    %1427 = vmatprep.subr.mxu0 0.0
    %1428 = vmatpush1.msra.mxu0 0.0
    %1429 = vmatprep.subr.mxu0 0.0
    %1430 = vmatpush1.msra.mxu0 0.0
    %1431 = vmatprep.subr.mxu0 0.0
    %1432 = vmatpush1.msra.mxu0 0.0
    %1433 = vmatprep.subr.mxu0 0.0
    %1434 = vmatpush1.msra.mxu0 0.0
    %1435 = vmatprep.subr.mxu0 0.0
    %1436 = vmatpush1.msra.mxu0 0.0
    %1437 = vmatprep.subr.mxu0 0.0
    %1438 = vmatpush1.msra.mxu0 0.0
    %1439 = vmatprep.subr.mxu0 0.0
    %1440 = vmatpush1.msra.mxu0 0.0
    %1441 = vmatprep.subr.mxu0 0.0
    %1442 = vmatpush1.msra.mxu0 0.0
    %1443 = vmatprep.subr.mxu0 0.0
    %1444 = vmatpush1.msra.mxu0 0.0
    %1445 = vmatprep.subr.mxu0 0.0
    %1446 = vmatpush1.msra.mxu0 0.0
    %1447 = vmatprep.subr.mxu0 0.0
    %1448 = vmatpush1.msra.mxu0 0.0
    %1449 = vmatprep.subr.mxu0 0.0
    %1450 = vmatpush1.msra.mxu0 0.0
    %1451 = vmatprep.subr.mxu0 0.0
    %1452 = vmatpush1.msra.mxu0 0.0
    %1453 = vmatprep.subr.mxu0 0.0
    %1454 = vmatpush1.msra.mxu0 0.0
    %1455 = vmatprep.subr.mxu0 0.0
    %1456 = vmatpush1.msra.mxu0 0.0
    %1457 = vmatprep.subr.mxu0 0.0
    %1458 = vmatpush1.msra.mxu0 0.0
    %1459 = vmatprep.subr.mxu0 0.0
    %1460 = vmatpush1.msra.mxu0 0.0
    %1461 = vmatprep.subr.mxu0 0.0
    %1462 = vmatpush1.msra.mxu0 0.0
    %1463 = vmatprep.subr.mxu0 0.0
    %1464 = vmatpush1.msra.mxu0 0.0
    %1465 = vmatprep.subr.mxu0 0.0
    %1466 = vmatpush1.msra.mxu0 0.0
    %1467 = vmatprep.mubr.f32.mxu0 0.0
    %1468 = vmatmul.mubr.f32.gmra.mrb[0].mxu0 %v1401
    %v1469 = vpop.f32.mrb[0].mxu0
    %v1470 = vadd.f32 %v1398, %v1469
    %v1471 = vpop.f32.mrb[0].mxu0
    %1472 = vdwg.mxu0
    %1473 = vst [vmem:[%s7] sm:$0x3] %v1470
    // Predicated region
    $region38: #{pilstm_forward.1} parent=1 // pred_check
      _
    $region39: #{pilstm_forward.1} parent=1 // pred_check_branch
      %1475 = sbr.rel (0) target = $region41
    $region40: #{pilstm_forward.1} parent=1 // pred_region
      _
    $region41: #{pilstm_forward.1} parent=1 // pred_fallthru
      _
    // Predicated region
    $region42: #{pilstm_forward.1} parent=1 // pred_check
      _
    $region43: #{pilstm_forward.1} parent=1 // pred_check_branch
      %1477 = sbr.rel (0) target = $region45
    $region44: #{pilstm_forward.1} parent=1 // pred_region
      _
    $region45: #{pilstm_forward.1} parent=1 // pred_fallthru
      _
    %1478 = vsyncpa [#allocation3], 1
    %1479 = vsyncpa [#allocation5], 1

</llo_original>
